<compile_context>
chip_gen: v5e
topology: v5e:2x2
jax: 0.10.0
libtpu: 0.0.40
codegen_flags: <defaults>
</compile_context>

<pallas_src>
import functools
import math

import jax
import jax.numpy as jnp
from jax.experimental import pallas as pl
from jax.experimental.pallas import tpu as pltpu


def attn_merge_kernel(scale_ref, nodeh_ref, srch_ref, ef_ref, dt_ref,
                      tw_ref, tb_ref,
                      wq_ref, bq_ref,
                      wkvn_ref, wkve_ref, wkvt_ref, bkv_ref,
                      hsum_ref, hexp_ref,
                      w1n_ref, w1c_ref, b1_ref, w2_ref, b2_ref,
                      h_out_ref, att_out_ref, *, n_head, n_nbr):
    Bt = nodeh_ref.shape[0]
    N = n_nbr
    BN = Bt * N
    E = wq_ref.shape[1]

    node_h = nodeh_ref[...]                               # (Bt, Dn)
    src_h = srch_ref[...]                                 # (BN, Dn)
    efeat = ef_ref[...]                                   # (BN, De)
    dt = dt_ref[...]                                      # (BN, 1)

    # ---- query projection ---------------------------------------------------
    # te(0) @ wq_time + bq is folded host-side into bq_ref, so the (B, Qd)
    # query tensor is never materialized.
    # TODO(synk): operands kept f32 to preserve reference numerics; cast
    # streamed activations + weights to bf16 (f32 accumulation) if tolerance
    # allows — halves HBM traffic, biggest win on v5e.
    q = (jnp.dot(node_h, wq_ref[...], preferred_element_type=jnp.float32)
         + bq_ref[...])                                   # (Bt, E)

    # ---- key/value projection (concat-free) ---------------------------------
    # keys = [src_h | edge_feat | te_C]; wkv is row-split host-side so the
    # (B, N, Kd) keys tensor never hits HBM; te_C is computed in VMEM (EUP).
    te = jnp.cos(dt * tw_ref[...] + tb_ref[...])          # (BN, Dt)
    kv = (jnp.dot(src_h, wkvn_ref[...], preferred_element_type=jnp.float32)
          + jnp.dot(efeat, wkve_ref[...], preferred_element_type=jnp.float32)
          + jnp.dot(te, wkvt_ref[...], preferred_element_type=jnp.float32)
          + bkv_ref[...])                                 # (BN, 2E)
    K = kv[:, :E]                                         # (BN, E)
    V = kv[:, E:]                                         # (BN, E)

    # ---- per-head scores, head-compressed -----------------------------------
    # hsum (E, n_head) sums each head's lanes with 1/sqrt(hd) folded in, so
    # all softmax work is n_head lanes wide instead of E lanes wide.
    q_rep = jnp.broadcast_to(q[:, None, :], (Bt, N, E)).reshape(BN, E)
    s = jnp.dot(q_rep * K, hsum_ref[...],
                preferred_element_type=jnp.float32).reshape(Bt, N, n_head)

    # softmax over the N neighbours; exact normalization (1/denom is only
    # (Bt,1,n_head) wide) keeps att numerically close to the reference.
    m = jnp.max(s, axis=1, keepdims=True)
    ez = jnp.exp(s - m)
    inv = 1.0 / jnp.sum(ez, axis=1, keepdims=True)
    p = ez * inv                                          # (Bt, N, nh)
    # TODO(synk): attention dropout omitted (eval-mode semantics).

    # attention map: mean over heads, rescaled by sum(q_ij)/sum(att); the
    # 1/n_head of the mean and sum(att)==B are folded into scale_ref.
    # TODO(synk): att/h_out lane dims (N, emb) < 128 -> masked stores; emit a
    # lane-dense transposed/flattened slab at production sizes.
    att_out_ref[...] = jnp.sum(p, axis=-1) * scale_ref[0, 0]

    # context: expand head probabilities back to E lanes on the MXU, weight V
    # and reduce over neighbours (heads land contiguously in E; no concat).
    p_rep = jnp.dot(p.reshape(BN, n_head), hexp_ref[...],
                    preferred_element_type=jnp.float32)   # (BN, E)
    ctx = jnp.sum((p_rep * V).reshape(Bt, N, E), axis=1)  # (Bt, E)

    # ---- MergeLayer with the MHA out-projection folded into fc1 -------------
    h1 = jnp.maximum(
        jnp.dot(node_h, w1n_ref[...], preferred_element_type=jnp.float32)
        + jnp.dot(ctx, w1c_ref[...], preferred_element_type=jnp.float32)
        + b1_ref[...], 0.0)
    h_out_ref[...] = (jnp.dot(h1, w2_ref[...], preferred_element_type=jnp.float32)
                      + b2_ref[...])


def _tpu_vmem_capacity():
    try:
        return int(pltpu.get_tpu_info().vmem_capacity_bytes)
    except Exception:
        return 64 << 20          # conservative fallback (v7x-sized)


def _default_block_b():
    # v5e/v6e (128 MiB VMEM): 512-row tiles reach ~85% of HBM roofline;
    # v7x (64 MiB VMEM, 2 TCs): smaller tiles so >=2 grid steps exist.
    return 256 if _tpu_vmem_capacity() <= (64 << 20) else 512


def _vmem_limit_bytes():
    # Raise the scoped-VMEM cap above the 16/32 MiB defaults, stay well below
    # physical capacity.
    return max(32 << 20, min(_tpu_vmem_capacity() * 3 // 4, 96 << 20))


def attn_merge_layer(node_h, src_h, edge_feat, delta_t, qij_scale, kparams,
                     n_head, block_b=None):
    """One ATTN layer's h_compute (time-encode + MHA + rescale + MergeLayer)."""
    B, Dn = node_h.shape
    BN, De = edge_feat.shape
    N = BN // B
    E = kparams["wq_node"].shape[1]
    Dt = kparams["tw"].shape[1]
    Dh1 = kparams["w1_node"].shape[1]
    Dh2 = kparams["w2"].shape[1]

    if block_b is None:
        block_b = _default_block_b()
    block_b = min(block_b, B)
    grid = (pl.cdiv(B, block_b),)

    row = lambda i: (i, 0)
    rep = lambda i: (0, 0)       # weights / biases stay VMEM-resident across B

    # TODO(synk): weight blocks could be single-buffered (pipeline_mode=
    # pl.Buffered(1)) and the grid axis CORE_PARALLEL on v7x; left at proven
    # defaults since the resident weights are only ~1 MiB at these dims.
    in_specs = [
        pl.BlockSpec(memory_space=pltpu.MemorySpace.SMEM),        # sum(q_ij)/(B*nh)
        pl.BlockSpec((block_b, Dn), row),                         # node_h
        pl.BlockSpec((block_b * N, Dn), row),                     # src_h (flat)
        pl.BlockSpec((block_b * N, De), row),                     # edge_feat (flat)
        pl.BlockSpec((block_b * N, 1), row),                      # delta_t (flat col)
        pl.BlockSpec((1, Dt), rep), pl.BlockSpec((1, Dt), rep),   # time w / phase
        pl.BlockSpec((Dn, E), rep), pl.BlockSpec((1, E), rep),    # wq_node, bq_eff
        pl.BlockSpec((Dn, 2 * E), rep),                           # wkv_node
        pl.BlockSpec((De, 2 * E), rep),                           # wkv_edge
        pl.BlockSpec((Dt, 2 * E), rep),                           # wkv_time
        pl.BlockSpec((1, 2 * E), rep),                            # bkv
        pl.BlockSpec((E, n_head), rep),                           # head sum (scaled)
        pl.BlockSpec((n_head, E), rep),                           # head expand
        pl.BlockSpec((Dn, Dh1), rep), pl.BlockSpec((E, Dh1), rep),  # w1 node/ctx
        pl.BlockSpec((1, Dh1), rep),
        pl.BlockSpec((Dh1, Dh2), rep), pl.BlockSpec((1, Dh2), rep),  # w2, b2
    ]
    out_specs = (pl.BlockSpec((block_b, Dh2), row),
                 pl.BlockSpec((block_b, N), row))

    args = (qij_scale, node_h, src_h, edge_feat, delta_t,
            kparams["tw"], kparams["tb"],
            kparams["wq_node"], kparams["bq_eff"],
            kparams["wkv_node"], kparams["wkv_edge"], kparams["wkv_time"],
            kparams["bkv"], kparams["head_sum"], kparams["head_expand"],
            kparams["w1_node"], kparams["w1_ctx"], kparams["b1_eff"],
            kparams["w2"], kparams["b2"])

    weight_bytes = sum(int(v.size) * v.dtype.itemsize for v in kparams.values())
    flops = int(2 * B * Dn * E
                + 2 * BN * ((Dn + De + Dt) * 2 * E + 2 * E * n_head + E)
                + 2 * B * (Dn * Dh1 + E * Dh1 + Dh1 * Dh2))
    cost = pl.CostEstimate(
        flops=flops,
        transcendentals=int(BN * (Dt + n_head)),
        bytes_accessed=int(4 * (B * Dn + BN * (Dn + De + 1) + B * Dh2 + BN)
                           + weight_bytes))

    h_out, att_out = pl.pallas_call(
        functools.partial(attn_merge_kernel, n_head=n_head, n_nbr=N),
        out_shape=(jax.ShapeDtypeStruct((B, Dh2), jnp.float32),
                   jax.ShapeDtypeStruct((B, N), jnp.float32)),
        grid=grid,
        in_specs=in_specs,
        out_specs=out_specs,
        compiler_params=pltpu.CompilerParams(
            dimension_semantics=("parallel",),
            vmem_limit_bytes=_vmem_limit_bytes()),
        cost_estimate=cost,
    )(*args)
    return h_out, att_out


def prepare_kernel_params(p, time_w, time_b, node_feat_dim, edge_feat_dim,
                          n_head):
    """Host-side algebraic folding: query time-encode bias, K|V fusion + row
    split (concat-free keys), scaled head-sum / head-expand matrices, and the
    MHA out-projection folded into MergeLayer.fc1."""
    Qd, E = p["wq"].shape                       # Qd == E (embed_dim)
    Dn, De = node_feat_dim, edge_feat_dim
    Dt = Qd - Dn                                # time dimension
    hd = E // n_head
    head_of = jnp.arange(E, dtype=jnp.int32) // hd
    heads = jnp.arange(n_head, dtype=jnp.int32)
    head_sum = ((head_of[:, None] == heads[None, :]).astype(jnp.float32)
                / math.sqrt(hd))                                    # (E, nh)
    head_expand = (heads[:, None] == head_of[None, :]).astype(jnp.float32)  # (nh, E)

    # query = cat([h, te(0)]);  te(0) @ wq_time folded into the bias.
    te0 = jnp.cos(time_b)[None, :]                                  # (1, Dt)
    bq_eff = te0 @ p["wq"][Dn:] + p["bq"]

    # keys = cat([src_h, edge_feat, te(dt)]); fuse K|V and split by row group.
    wkv = jnp.concatenate([p["wk"], p["wv"]], axis=1)               # (Kd, 2E)
    bkv = jnp.concatenate([p["bk"], p["bv"]], axis=1)               # (1, 2E)

    # MergeLayer fc1 over cat([node_h, h_before]); fold wo/bo into the attn half.
    w1_attn = p["w1"][Dn:]
    return {
        "tw": time_w.reshape(1, Dt).astype(jnp.float32),
        "tb": time_b.reshape(1, Dt).astype(jnp.float32),
        "wq_node": p["wq"][:Dn], "bq_eff": bq_eff,
        "wkv_node": wkv[:Dn], "wkv_edge": wkv[Dn:Dn + De],
        "wkv_time": wkv[Dn + De:], "bkv": bkv,
        "head_sum": head_sum, "head_expand": head_expand,
        "w1_node": p["w1"][:Dn], "w1_ctx": p["wo"] @ w1_attn,
        "b1_eff": p["bo"] @ w1_attn + p["b1"],
        "w2": p["w2"], "b2": p["b2"],
    }


def attn_forward(blocks, h0, kparams_list, n_head, n_layer):
    """JAX-glue equivalent of ATTN.forward over a list of (synthetic) blocks."""
    h = h0
    attn_map = None
    for l in range(n_layer):
        blk = blocks[l]
        nbr = blk["nbr_idx"]                     # (B, N) int32 src node ids
        B, N = nbr.shape

        # TODO(synk): the h[nbr] gather still round-trips HBM; an in-kernel
        # scalar-prefetch (PrefetchScalarGridSpec) row gather would remove it.
        src_h = h[nbr].reshape(B * N, -1)                         # (B*N, Dn)
        edge_feat = blk["edge_feat"].reshape(B * N, -1)           # (B*N, De)
        delta_t = blk["delta_t"].reshape(B * N, 1)                # (B*N, 1)

        # att = sum(q_ij) * att / sum(att); sum(att) == B (softmax rows sum
        # to 1), and the head-mean 1/n_head is folded into the same scalar.
        qij_scale = (jnp.sum(blk["q_ij"]) / (B * n_head)).reshape(1, 1)
        qij_scale = qij_scale.astype(jnp.float32)

        h_new, att = attn_merge_layer(h, src_h, edge_feat, delta_t, qij_scale,
                                      kparams_list[l], n_head)

        if l == n_layer - 1:
            attn_map = -jnp.ones((blk["num_edges"],), jnp.float32)
            attn_map = attn_map.at[blk["eid"].reshape(-1)].set(att.reshape(-1))
        h = h_new            # blocks[l+1].srcdata['h'] = blocks[l].dstdata['h']
    return h, attn_map


if __name__ == "__main__":
    B, N = 8, 8                      # dst nodes, neighbors per node
    node_feat_dim = 16
    time_dim = 16
    edge_feat_dim = 8
    emb_dim = 16                     # args.emb_dimension (== node_feat_dim)
    n_head = 2
    n_layer = 2
    query_dim = node_feat_dim + time_dim                    # 32
    key_dim = node_feat_dim + time_dim + edge_feat_dim      # 40

    # deterministic time-encoder params
    time_w = (1.0 / (10.0 ** jnp.linspace(0.0, 4.0, time_dim))).astype(jnp.float32)
    time_b = jnp.zeros((time_dim,), jnp.float32)

    key = jax.random.PRNGKey(0)
    keys_rng = jax.random.split(key, 64)
    ki = iter(keys_rng)

    def xavier_normal_T(k, fan_in, fan_out):
        std = math.sqrt(2.0 / (fan_in + fan_out))
        return (std * jax.random.normal(k, (fan_in, fan_out))).astype(jnp.float32)

    raw_params = []
    for _ in range(n_layer):
        raw_params.append({
            # MultiheadAttention(embed_dim=query_dim, kdim=vdim=key_dim)
            "wq": xavier_normal_T(next(ki), query_dim, query_dim),
            "bq": jnp.zeros((1, query_dim), jnp.float32),
            "wk": xavier_normal_T(next(ki), key_dim, query_dim),
            "bk": jnp.zeros((1, query_dim), jnp.float32),
            "wv": xavier_normal_T(next(ki), key_dim, query_dim),
            "bv": jnp.zeros((1, query_dim), jnp.float32),
            "wo": xavier_normal_T(next(ki), query_dim, query_dim),
            "bo": jnp.zeros((1, query_dim), jnp.float32),
            # MergeLayer(query_dim, node_feat_dim, node_feat_dim, emb_dim);
            # fc1 input is cat([node_h (Dn), h_before (E)]).
            "w1": xavier_normal_T(next(ki), node_feat_dim + query_dim, node_feat_dim),
            "b1": jnp.zeros((1, node_feat_dim), jnp.float32),
            "w2": xavier_normal_T(next(ki), node_feat_dim, emb_dim),
            "b2": jnp.zeros((1, emb_dim), jnp.float32),
        })
    kparams_list = [prepare_kernel_params(p, time_w, time_b, node_feat_dim,
                                          edge_feat_dim, n_head)
                    for p in raw_params]

    # synthetic graph blocks (dense mailbox: every dst node has N incoming edges)
    h0 = jax.random.normal(next(ki), (B, node_feat_dim), jnp.float32)
    blocks = []
    for _ in range(n_layer):
        blocks.append({
            "nbr_idx": jax.random.randint(next(ki), (B, N), 0, B),
            "edge_feat": jax.random.normal(next(ki), (B, N, edge_feat_dim), jnp.float32),
            "delta_t": jax.random.uniform(next(ki), (B, N), jnp.float32, 0.0, 100.0),
            "eid": jax.random.permutation(next(ki), jnp.arange(B * N)).reshape(B, N),
            "q_ij": jax.random.uniform(next(ki), (B, N), jnp.float32, 0.0, 1.0),
            "num_edges": B * N,
        })

    h_final, attn_map = attn_forward(blocks, h0, kparams_list, n_head, n_layer)
    jax.block_until_ready((h_final, attn_map))
    assert h_final.shape == (B, emb_dim) and attn_map.shape == (B * N,)
    print("KERNEL_OK")
</pallas_src>

<mosaic_0001>
module attributes {stable_mosaic.version = 11 : i64} {
  func.func @attn_merge_kernel(%arg0: i32, %arg1: memref<1x1xf32, #tpu.memory_space<smem>>, %arg2: memref<8x16xf32, #tpu.memory_space<vmem>>, %arg3: memref<64x16xf32, #tpu.memory_space<vmem>>, %arg4: memref<64x8xf32, #tpu.memory_space<vmem>>, %arg5: memref<64x1xf32, #tpu.memory_space<vmem>>, %arg6: memref<1x16xf32, #tpu.memory_space<vmem>>, %arg7: memref<1x16xf32, #tpu.memory_space<vmem>>, %arg8: memref<16x32xf32, #tpu.memory_space<vmem>>, %arg9: memref<1x32xf32, #tpu.memory_space<vmem>>, %arg10: memref<16x64xf32, #tpu.memory_space<vmem>>, %arg11: memref<8x64xf32, #tpu.memory_space<vmem>>, %arg12: memref<16x64xf32, #tpu.memory_space<vmem>>, %arg13: memref<1x64xf32, #tpu.memory_space<vmem>>, %arg14: memref<32x2xf32, #tpu.memory_space<vmem>>, %arg15: memref<2x32xf32, #tpu.memory_space<vmem>>, %arg16: memref<16x16xf32, #tpu.memory_space<vmem>>, %arg17: memref<32x16xf32, #tpu.memory_space<vmem>>, %arg18: memref<1x16xf32, #tpu.memory_space<vmem>>, %arg19: memref<16x16xf32, #tpu.memory_space<vmem>>, %arg20: memref<1x16xf32, #tpu.memory_space<vmem>>, %arg21: memref<8x16xf32, #tpu.memory_space<vmem>>, %arg22: memref<8x8xf32, #tpu.memory_space<vmem>>) attributes {dimension_semantics = [#tpu.dimension_semantics<parallel>], iteration_bounds = array<i64: 1>, scalar_prefetch = 0 : i64, scratch_operands = 0 : i64, tpu.core_type = #tpu.core_type<tc>, window_params = [{transform_indices = @transform_0, window_bounds = array<i64: 1, 1>}, {transform_indices = @transform_1, window_bounds = array<i64: 8, 16>}, {transform_indices = @transform_2, window_bounds = array<i64: 64, 16>}, {transform_indices = @transform_3, window_bounds = array<i64: 64, 8>}, {transform_indices = @transform_4, window_bounds = array<i64: 64, 1>}, {pipeline_mode = #tpu.pipeline_mode<synchronous>, transform_indices = @transform_5, window_bounds = array<i64: 1, 16>}, {pipeline_mode = #tpu.pipeline_mode<synchronous>, transform_indices = @transform_6, window_bounds = array<i64: 1, 16>}, {pipeline_mode = #tpu.pipeline_mode<synchronous>, transform_indices = @transform_7, window_bounds = array<i64: 16, 32>}, {pipeline_mode = #tpu.pipeline_mode<synchronous>, transform_indices = @transform_8, window_bounds = array<i64: 1, 32>}, {pipeline_mode = #tpu.pipeline_mode<synchronous>, transform_indices = @transform_9, window_bounds = array<i64: 16, 64>}, {pipeline_mode = #tpu.pipeline_mode<synchronous>, transform_indices = @transform_10, window_bounds = array<i64: 8, 64>}, {pipeline_mode = #tpu.pipeline_mode<synchronous>, transform_indices = @transform_11, window_bounds = array<i64: 16, 64>}, {pipeline_mode = #tpu.pipeline_mode<synchronous>, transform_indices = @transform_12, window_bounds = array<i64: 1, 64>}, {pipeline_mode = #tpu.pipeline_mode<synchronous>, transform_indices = @transform_13, window_bounds = array<i64: 32, 2>}, {pipeline_mode = #tpu.pipeline_mode<synchronous>, transform_indices = @transform_14, window_bounds = array<i64: 2, 32>}, {pipeline_mode = #tpu.pipeline_mode<synchronous>, transform_indices = @transform_15, window_bounds = array<i64: 16, 16>}, {pipeline_mode = #tpu.pipeline_mode<synchronous>, transform_indices = @transform_16, window_bounds = array<i64: 32, 16>}, {pipeline_mode = #tpu.pipeline_mode<synchronous>, transform_indices = @transform_17, window_bounds = array<i64: 1, 16>}, {pipeline_mode = #tpu.pipeline_mode<synchronous>, transform_indices = @transform_18, window_bounds = array<i64: 16, 16>}, {pipeline_mode = #tpu.pipeline_mode<synchronous>, transform_indices = @transform_19, window_bounds = array<i64: 1, 16>}, {transform_indices = @transform_20, window_bounds = array<i64: 8, 16>}, {transform_indices = @transform_21, window_bounds = array<i64: 8, 8>}]} {
    %c0 = arith.constant 0 : index
    %c0_0 = arith.constant 0 : index
    %0 = vector.load %arg2[%c0, %c0_0] : memref<8x16xf32, #tpu.memory_space<vmem>>, vector<8x16xf32>
    %c0_1 = arith.constant 0 : index
    %c0_2 = arith.constant 0 : index
    %1 = vector.load %arg3[%c0_1, %c0_2] : memref<64x16xf32, #tpu.memory_space<vmem>>, vector<64x16xf32>
    %c0_3 = arith.constant 0 : index
    %c0_4 = arith.constant 0 : index
    %2 = vector.load %arg4[%c0_3, %c0_4] : memref<64x8xf32, #tpu.memory_space<vmem>>, vector<64x8xf32>
    %c0_5 = arith.constant 0 : index
    %c0_6 = arith.constant 0 : index
    %3 = vector.load %arg5[%c0_5, %c0_6] : memref<64x1xf32, #tpu.memory_space<vmem>>, vector<64x1xf32>
    %c0_7 = arith.constant 0 : index
    %c0_8 = arith.constant 0 : index
    %4 = vector.load %arg8[%c0_7, %c0_8] : memref<16x32xf32, #tpu.memory_space<vmem>>, vector<16x32xf32>
    %cst = arith.constant dense<0.000000e+00> : vector<8x32xf32>
    %5 = tpu.matmul %0, %4, %cst {dimension_numbers = #tpu.dot_dimension_numbers<[1], [0], [0], [1], [0, 0, 1, 1], [], []>} : vector<8x16xf32>, vector<16x32xf32>, vector<8x32xf32> -> vector<8x32xf32>
    %c0_9 = arith.constant 0 : index
    %c0_10 = arith.constant 0 : index
    %6 = vector.load %arg9[%c0_9, %c0_10] : memref<1x32xf32, #tpu.memory_space<vmem>>, vector<1x32xf32>
    %7 = vector.broadcast %6 : vector<1x32xf32> to vector<8x32xf32>
    %8 = arith.addf %5, %7 : vector<8x32xf32>
    %c0_11 = arith.constant 0 : index
    %c0_12 = arith.constant 0 : index
    %9 = vector.load %arg6[%c0_11, %c0_12] : memref<1x16xf32, #tpu.memory_space<vmem>>, vector<1x16xf32>
    %10 = vector.broadcast %3 : vector<64x1xf32> to vector<64x16xf32>
    %11 = vector.broadcast %9 : vector<1x16xf32> to vector<64x16xf32>
    %12 = arith.mulf %10, %11 : vector<64x16xf32>
    %c0_13 = arith.constant 0 : index
    %c0_14 = arith.constant 0 : index
    %13 = vector.load %arg7[%c0_13, %c0_14] : memref<1x16xf32, #tpu.memory_space<vmem>>, vector<1x16xf32>
    %14 = vector.broadcast %13 : vector<1x16xf32> to vector<64x16xf32>
    %15 = arith.addf %12, %14 : vector<64x16xf32>
    %16 = math.cos %15 : vector<64x16xf32>
    %c0_15 = arith.constant 0 : index
    %c0_16 = arith.constant 0 : index
    %17 = vector.load %arg10[%c0_15, %c0_16] : memref<16x64xf32, #tpu.memory_space<vmem>>, vector<16x64xf32>
    %cst_17 = arith.constant dense<0.000000e+00> : vector<64x64xf32>
    %18 = tpu.matmul %1, %17, %cst_17 {dimension_numbers = #tpu.dot_dimension_numbers<[1], [0], [0], [1], [0, 0, 1, 1], [], []>} : vector<64x16xf32>, vector<16x64xf32>, vector<64x64xf32> -> vector<64x64xf32>
    %c0_18 = arith.constant 0 : index
    %c0_19 = arith.constant 0 : index
    %19 = vector.load %arg11[%c0_18, %c0_19] : memref<8x64xf32, #tpu.memory_space<vmem>>, vector<8x64xf32>
    %cst_20 = arith.constant dense<0.000000e+00> : vector<64x64xf32>
    %20 = tpu.matmul %2, %19, %cst_20 {dimension_numbers = #tpu.dot_dimension_numbers<[1], [0], [0], [1], [0, 0, 1, 1], [], []>} : vector<64x8xf32>, vector<8x64xf32>, vector<64x64xf32> -> vector<64x64xf32>
    %21 = arith.addf %18, %20 : vector<64x64xf32>
    %c0_21 = arith.constant 0 : index
    %c0_22 = arith.constant 0 : index
    %22 = vector.load %arg12[%c0_21, %c0_22] : memref<16x64xf32, #tpu.memory_space<vmem>>, vector<16x64xf32>
    %cst_23 = arith.constant dense<0.000000e+00> : vector<64x64xf32>
    %23 = tpu.matmul %16, %22, %cst_23 {dimension_numbers = #tpu.dot_dimension_numbers<[1], [0], [0], [1], [0, 0, 1, 1], [], []>} : vector<64x16xf32>, vector<16x64xf32>, vector<64x64xf32> -> vector<64x64xf32>
    %24 = arith.addf %21, %23 : vector<64x64xf32>
    %c0_24 = arith.constant 0 : index
    %c0_25 = arith.constant 0 : index
    %25 = vector.load %arg13[%c0_24, %c0_25] : memref<1x64xf32, #tpu.memory_space<vmem>>, vector<1x64xf32>
    %26 = vector.broadcast %25 : vector<1x64xf32> to vector<64x64xf32>
    %27 = arith.addf %24, %26 : vector<64x64xf32>
    %28 = vector.extract_strided_slice %27 {offsets = [0, 0], sizes = [64, 32], strides = [1, 1]} : vector<64x64xf32> to vector<64x32xf32>
    %29 = vector.extract_strided_slice %27 {offsets = [0, 32], sizes = [64, 32], strides = [1, 1]} : vector<64x64xf32> to vector<64x32xf32>
    %30 = vector.shape_cast %8 : vector<8x32xf32> to vector<8x1x32xf32>
    %31 = vector.shape_cast %30 : vector<8x1x32xf32> to vector<8x1x32xf32>
    %32 = vector.broadcast %31 : vector<8x1x32xf32> to vector<8x8x32xf32>
    %33 = vector.shape_cast %32 : vector<8x8x32xf32> to vector<64x32xf32>
    %34 = arith.mulf %33, %28 : vector<64x32xf32>
    %c0_26 = arith.constant 0 : index
    %c0_27 = arith.constant 0 : index
    %35 = vector.load %arg14[%c0_26, %c0_27] : memref<32x2xf32, #tpu.memory_space<vmem>>, vector<32x2xf32>
    %cst_28 = arith.constant dense<0.000000e+00> : vector<64x2xf32>
    %36 = tpu.matmul %34, %35, %cst_28 {dimension_numbers = #tpu.dot_dimension_numbers<[1], [0], [0], [1], [0, 0, 1, 1], [], []>} : vector<64x32xf32>, vector<32x2xf32>, vector<64x2xf32> -> vector<64x2xf32>
    %37 = vector.shape_cast %36 : vector<64x2xf32> to vector<8x8x2xf32>
    %cst_29 = arith.constant dense<0xFF800000> : vector<8x2xf32>
    %38 = vector.multi_reduction <maximumf>, %37, %cst_29 [1] : vector<8x8x2xf32> to vector<8x2xf32>
    %39 = vector.shape_cast %38 : vector<8x2xf32> to vector<8x1x2xf32>
    %40 = vector.broadcast %39 : vector<8x1x2xf32> to vector<8x8x2xf32>
    %41 = arith.subf %37, %40 : vector<8x8x2xf32>
    %42 = math.exp %41 : vector<8x8x2xf32>
    %cst_30 = arith.constant dense<0.000000e+00> : vector<8x2xf32>
    %43 = vector.multi_reduction <add>, %42, %cst_30 [1] : vector<8x8x2xf32> to vector<8x2xf32>
    %44 = vector.shape_cast %43 : vector<8x2xf32> to vector<8x1x2xf32>
    %cst_31 = arith.constant 1.000000e+00 : f32
    %45 = vector.broadcast %cst_31 : f32 to vector<8x1x2xf32>
    %46 = arith.divf %45, %44 : vector<8x1x2xf32>
    %47 = vector.broadcast %46 : vector<8x1x2xf32> to vector<8x8x2xf32>
    %48 = arith.mulf %42, %47 : vector<8x8x2xf32>
    %cst_32 = arith.constant dense<0.000000e+00> : vector<8x8xf32>
    %49 = vector.multi_reduction <add>, %48, %cst_32 [2] : vector<8x8x2xf32> to vector<8x8xf32>
    %c0_33 = arith.constant 0 : index
    %c0_34 = arith.constant 0 : index
    %50 = memref.load %arg1[%c0_33, %c0_34] : memref<1x1xf32, #tpu.memory_space<smem>>
    %51 = vector.broadcast %50 : f32 to vector<8x8xf32>
    %52 = arith.mulf %49, %51 : vector<8x8xf32>
    %c0_35 = arith.constant 0 : index
    %c0_36 = arith.constant 0 : index
    %53 = vector.load %arg22[%c0_35, %c0_36] : memref<8x8xf32, #tpu.memory_space<vmem>>, vector<8x8xf32>
    tpu.vector_store %arg22[%c0_35, %c0_36], %52 {strides = array<i32>} : memref<8x8xf32, #tpu.memory_space<vmem>>, vector<8x8xf32>,
    %54 = vector.shape_cast %48 : vector<8x8x2xf32> to vector<64x2xf32>
    %c0_37 = arith.constant 0 : index
    %c0_38 = arith.constant 0 : index
    %55 = vector.load %arg15[%c0_37, %c0_38] : memref<2x32xf32, #tpu.memory_space<vmem>>, vector<2x32xf32>
    %cst_39 = arith.constant dense<0.000000e+00> : vector<64x32xf32>
    %56 = tpu.matmul %54, %55, %cst_39 {dimension_numbers = #tpu.dot_dimension_numbers<[1], [0], [0], [1], [0, 0, 1, 1], [], []>} : vector<64x2xf32>, vector<2x32xf32>, vector<64x32xf32> -> vector<64x32xf32>
    %57 = arith.mulf %56, %29 : vector<64x32xf32>
    %58 = vector.shape_cast %57 : vector<64x32xf32> to vector<8x8x32xf32>
    %cst_40 = arith.constant dense<0.000000e+00> : vector<8x32xf32>
    %59 = vector.multi_reduction <add>, %58, %cst_40 [1] : vector<8x8x32xf32> to vector<8x32xf32>
    %c0_41 = arith.constant 0 : index
    %c0_42 = arith.constant 0 : index
    %60 = vector.load %arg16[%c0_41, %c0_42] : memref<16x16xf32, #tpu.memory_space<vmem>>, vector<16x16xf32>
    %cst_43 = arith.constant dense<0.000000e+00> : vector<8x16xf32>
    %61 = tpu.matmul %0, %60, %cst_43 {dimension_numbers = #tpu.dot_dimension_numbers<[1], [0], [0], [1], [0, 0, 1, 1], [], []>} : vector<8x16xf32>, vector<16x16xf32>, vector<8x16xf32> -> vector<8x16xf32>
    %c0_44 = arith.constant 0 : index
    %c0_45 = arith.constant 0 : index
    %62 = vector.load %arg17[%c0_44, %c0_45] : memref<32x16xf32, #tpu.memory_space<vmem>>, vector<32x16xf32>
    %cst_46 = arith.constant dense<0.000000e+00> : vector<8x16xf32>
    %63 = tpu.matmul %59, %62, %cst_46 {dimension_numbers = #tpu.dot_dimension_numbers<[1], [0], [0], [1], [0, 0, 1, 1], [], []>} : vector<8x32xf32>, vector<32x16xf32>, vector<8x16xf32> -> vector<8x16xf32>
    %64 = arith.addf %61, %63 : vector<8x16xf32>
    %c0_47 = arith.constant 0 : index
    %c0_48 = arith.constant 0 : index
    %65 = vector.load %arg18[%c0_47, %c0_48] : memref<1x16xf32, #tpu.memory_space<vmem>>, vector<1x16xf32>
    %66 = vector.broadcast %65 : vector<1x16xf32> to vector<8x16xf32>
    %67 = arith.addf %64, %66 : vector<8x16xf32>
    %cst_49 = arith.constant 0.000000e+00 : f32
    %68 = vector.broadcast %cst_49 : f32 to vector<8x16xf32>
    %69 = arith.maximumf %67, %68 : vector<8x16xf32>
    %c0_50 = arith.constant 0 : index
    %c0_51 = arith.constant 0 : index
    %70 = vector.load %arg19[%c0_50, %c0_51] : memref<16x16xf32, #tpu.memory_space<vmem>>, vector<16x16xf32>
    %cst_52 = arith.constant dense<0.000000e+00> : vector<8x16xf32>
    %71 = tpu.matmul %69, %70, %cst_52 {dimension_numbers = #tpu.dot_dimension_numbers<[1], [0], [0], [1], [0, 0, 1, 1], [], []>} : vector<8x16xf32>, vector<16x16xf32>, vector<8x16xf32> -> vector<8x16xf32>
    %c0_53 = arith.constant 0 : index
    %c0_54 = arith.constant 0 : index
    %72 = vector.load %arg20[%c0_53, %c0_54] : memref<1x16xf32, #tpu.memory_space<vmem>>, vector<1x16xf32>
    %73 = vector.broadcast %72 : vector<1x16xf32> to vector<8x16xf32>
    %74 = arith.addf %71, %73 : vector<8x16xf32>
    %c0_55 = arith.constant 0 : index
    %c0_56 = arith.constant 0 : index
    %75 = vector.load %arg21[%c0_55, %c0_56] : memref<8x16xf32, #tpu.memory_space<vmem>>, vector<8x16xf32>
    tpu.vector_store %arg21[%c0_55, %c0_56], %74 {strides = array<i32>} : memref<8x16xf32, #tpu.memory_space<vmem>>, vector<8x16xf32>,
    return
  }
  func.func @transform_0(%arg0: i32) -> (i32, i32) {
    %c0_i32 = arith.constant 0 : i32
    %c0_i32_0 = arith.constant 0 : i32
    %c0_i32_1 = arith.constant 0 : i32
    return %c0_i32, %c0_i32_0 : i32, i32
  }
  func.func @transform_1(%arg0: i32) -> (i32, i32) {
    %c0_i32 = arith.constant 0 : i32
    %c0_i32_0 = arith.constant 0 : i32
    return %arg0, %c0_i32 : i32, i32
  }
  func.func @transform_2(%arg0: i32) -> (i32, i32) {
    %c0_i32 = arith.constant 0 : i32
    %c0_i32_0 = arith.constant 0 : i32
    return %arg0, %c0_i32 : i32, i32
  }
  func.func @transform_3(%arg0: i32) -> (i32, i32) {
    %c0_i32 = arith.constant 0 : i32
    %c0_i32_0 = arith.constant 0 : i32
    return %arg0, %c0_i32 : i32, i32
  }
  func.func @transform_4(%arg0: i32) -> (i32, i32) {
    %c0_i32 = arith.constant 0 : i32
    %c0_i32_0 = arith.constant 0 : i32
    return %arg0, %c0_i32 : i32, i32
  }
  func.func @transform_5(%arg0: i32) -> (i32, i32) {
    %c0_i32 = arith.constant 0 : i32
    %c0_i32_0 = arith.constant 0 : i32
    %c0_i32_1 = arith.constant 0 : i32
    return %c0_i32, %c0_i32_0 : i32, i32
  }
  func.func @transform_6(%arg0: i32) -> (i32, i32) {
    %c0_i32 = arith.constant 0 : i32
    %c0_i32_0 = arith.constant 0 : i32
    %c0_i32_1 = arith.constant 0 : i32
    return %c0_i32, %c0_i32_0 : i32, i32
  }
  func.func @transform_7(%arg0: i32) -> (i32, i32) {
    %c0_i32 = arith.constant 0 : i32
    %c0_i32_0 = arith.constant 0 : i32
    %c0_i32_1 = arith.constant 0 : i32
    return %c0_i32, %c0_i32_0 : i32, i32
  }
  func.func @transform_8(%arg0: i32) -> (i32, i32) {
    %c0_i32 = arith.constant 0 : i32
    %c0_i32_0 = arith.constant 0 : i32
    %c0_i32_1 = arith.constant 0 : i32
    return %c0_i32, %c0_i32_0 : i32, i32
  }
  func.func @transform_9(%arg0: i32) -> (i32, i32) {
    %c0_i32 = arith.constant 0 : i32
    %c0_i32_0 = arith.constant 0 : i32
    %c0_i32_1 = arith.constant 0 : i32
    return %c0_i32, %c0_i32_0 : i32, i32
  }
  func.func @transform_10(%arg0: i32) -> (i32, i32) {
    %c0_i32 = arith.constant 0 : i32
    %c0_i32_0 = arith.constant 0 : i32
    %c0_i32_1 = arith.constant 0 : i32
    return %c0_i32, %c0_i32_0 : i32, i32
  }
  func.func @transform_11(%arg0: i32) -> (i32, i32) {
    %c0_i32 = arith.constant 0 : i32
    %c0_i32_0 = arith.constant 0 : i32
    %c0_i32_1 = arith.constant 0 : i32
    return %c0_i32, %c0_i32_0 : i32, i32
  }
  func.func @transform_12(%arg0: i32) -> (i32, i32) {
    %c0_i32 = arith.constant 0 : i32
    %c0_i32_0 = arith.constant 0 : i32
    %c0_i32_1 = arith.constant 0 : i32
    return %c0_i32, %c0_i32_0 : i32, i32
  }
  func.func @transform_13(%arg0: i32) -> (i32, i32) {
    %c0_i32 = arith.constant 0 : i32
    %c0_i32_0 = arith.constant 0 : i32
    %c0_i32_1 = arith.constant 0 : i32
    return %c0_i32, %c0_i32_0 : i32, i32
  }
  func.func @transform_14(%arg0: i32) -> (i32, i32) {
    %c0_i32 = arith.constant 0 : i32
    %c0_i32_0 = arith.constant 0 : i32
    %c0_i32_1 = arith.constant 0 : i32
    return %c0_i32, %c0_i32_0 : i32, i32
  }
  func.func @transform_15(%arg0: i32) -> (i32, i32) {
    %c0_i32 = arith.constant 0 : i32
    %c0_i32_0 = arith.constant 0 : i32
    %c0_i32_1 = arith.constant 0 : i32
    return %c0_i32, %c0_i32_0 : i32, i32
  }
  func.func @transform_16(%arg0: i32) -> (i32, i32) {
    %c0_i32 = arith.constant 0 : i32
    %c0_i32_0 = arith.constant 0 : i32
    %c0_i32_1 = arith.constant 0 : i32
    return %c0_i32, %c0_i32_0 : i32, i32
  }
  func.func @transform_17(%arg0: i32) -> (i32, i32) {
    %c0_i32 = arith.constant 0 : i32
    %c0_i32_0 = arith.constant 0 : i32
    %c0_i32_1 = arith.constant 0 : i32
    return %c0_i32, %c0_i32_0 : i32, i32
  }
  func.func @transform_18(%arg0: i32) -> (i32, i32) {
    %c0_i32 = arith.constant 0 : i32
    %c0_i32_0 = arith.constant 0 : i32
    %c0_i32_1 = arith.constant 0 : i32
    return %c0_i32, %c0_i32_0 : i32, i32
  }
  func.func @transform_19(%arg0: i32) -> (i32, i32) {
    %c0_i32 = arith.constant 0 : i32
    %c0_i32_0 = arith.constant 0 : i32
    %c0_i32_1 = arith.constant 0 : i32
    return %c0_i32, %c0_i32_0 : i32, i32
  }
  func.func @transform_20(%arg0: i32) -> (i32, i32) {
    %c0_i32 = arith.constant 0 : i32
    %c0_i32_0 = arith.constant 0 : i32
    return %arg0, %c0_i32 : i32, i32
  }
  func.func @transform_21(%arg0: i32) -> (i32, i32) {
    %c0_i32 = arith.constant 0 : i32
    %c0_i32_0 = arith.constant 0 : i32
    return %arg0, %c0_i32 : i32, i32
  }
}

</mosaic_0001>

<llo_original>
// kernel: tpu_custom_call.1
$region0: #{tpu_custom_call.1}
  #allocation0 [shape = 'u32[]', space=smem, size = 0x4, offset = 0x4, fixed_abs, tag = 'smem constant byte address 0x4 - core index']
  #allocation1 [shape = 'u32[72,128]{1,0:T(1,128)}', space=vmem, size = 0x9000, scoped, tag = 'internal scratch']
  #allocation2 [shape = 'f32[1,1]{1,0:T(1,128)S(6)}', space=smem, size = 0x200, scoped, tag = 'scoped memory for tpu_custom_call.1']
  %s0 = inlined_call_operand.<no memory space> [shape: f32[1,1], index: 0, kind: input, shape index: {}]
  %s1 = inlined_call_operand.vmem [shape: f32[8,16], index: 1, kind: input, shape index: {}]
  %s2 = inlined_call_operand.vmem [shape: f32[64,16], index: 2, kind: input, shape index: {}]
  %s3 = inlined_call_operand.vmem [shape: f32[64,8], index: 3, kind: input, shape index: {}]
  %s4 = inlined_call_operand.vmem [shape: f32[64,1], index: 4, kind: input, shape index: {}]
  %s5 = inlined_call_operand.vmem [shape: f32[1,16], index: 5, kind: input, shape index: {}]
  %s6 = inlined_call_operand.vmem [shape: f32[1,16], index: 6, kind: input, shape index: {}]
  %s7 = inlined_call_operand.vmem [shape: f32[16,32], index: 7, kind: input, shape index: {}]
  %s8 = inlined_call_operand.vmem [shape: f32[1,32], index: 8, kind: input, shape index: {}]
  %s9 = inlined_call_operand.vmem [shape: f32[16,64], index: 9, kind: input, shape index: {}]
  %s10 = inlined_call_operand.vmem [shape: f32[8,64], index: 10, kind: input, shape index: {}]
  %s11 = inlined_call_operand.vmem [shape: f32[16,64], index: 11, kind: input, shape index: {}]
  %s12 = inlined_call_operand.vmem [shape: f32[1,64], index: 12, kind: input, shape index: {}]
  %s13 = inlined_call_operand.vmem [shape: f32[32,2], index: 13, kind: input, shape index: {}]
  %s14 = inlined_call_operand.vmem [shape: f32[2,32], index: 14, kind: input, shape index: {}]
  %s15 = inlined_call_operand.vmem [shape: f32[16,16], index: 15, kind: input, shape index: {}]
  %s16 = inlined_call_operand.vmem [shape: f32[32,16], index: 16, kind: input, shape index: {}]
  %s17 = inlined_call_operand.vmem [shape: f32[1,16], index: 17, kind: input, shape index: {}]
  %s18 = inlined_call_operand.vmem [shape: f32[16,16], index: 18, kind: input, shape index: {}]
  %s19 = inlined_call_operand.vmem [shape: f32[1,16], index: 19, kind: input, shape index: {}]
  %s20 = inlined_call_operand.hbm [shape: f32[8,16], index: 20, kind: output, shape index: {0}]
  %s21 = inlined_call_operand.hbm [shape: f32[8,8], index: 21, kind: output, shape index: {1}]
  %22 = xla_tuple %s20, %s21
  %s23 = sld [smem:[#allocation0]]
  $region98: #{tpu_custom_call.1} parent=0
    _
  %s25 = ssub.s32 1, %s23
  %s26 = scalar_select 0, %s25, %s23
  %27 = sst [smem:[#allocation2]] %s0
  $region1: #{tpu_custom_call.1} parent=0
    #allocation3 [shape = 'u8[4096]{0}', space=vmem, size = 0x1000, scoped, tag = 'output window, operand 0, single buffered']
    #allocation4 [shape = 's32[1]{0}', space=sflag, size = 0x4, scoped, tag = 'scoped memory for tpu_custom_call.1']
    #allocation5 [shape = 'u8[4096]{0}', space=vmem, size = 0x1000, scoped, tag = 'output window, operand 1, single buffered']
    #allocation6 [shape = 's32[1]{0}', space=sflag, size = 0x4, scoped, tag = 'scoped memory for tpu_custom_call.1']
    %28 = vsyncpa [#allocation4], 0
    %29 = vsyncpa [#allocation6], 0
    // Predicated region
    $region2: #{tpu_custom_call.1} parent=1 // pred_check
      _
    $region3: #{tpu_custom_call.1} parent=1 // pred_check_branch
      %31 = sbr.rel (0) target = $region5
    $region4: #{tpu_custom_call.1} parent=1 // pred_region
      _
    $region5: #{tpu_custom_call.1} parent=1 // pred_fallthru
      _
    // Predicated region
    $region6: #{tpu_custom_call.1} parent=1 // pred_check
      _
    $region7: #{tpu_custom_call.1} parent=1 // pred_check_branch
      %33 = sbr.rel (0) target = $region9
    $region8: #{tpu_custom_call.1} parent=1 // pred_region
      _
    $region9: #{tpu_custom_call.1} parent=1 // pred_fallthru
      _
    // Predicated region
    $region10: #{tpu_custom_call.1} parent=1 // pred_check
      _
    $region11: #{tpu_custom_call.1} parent=1 // pred_check_branch
      %35 = sbr.rel (0) target = $region13
    $region12: #{tpu_custom_call.1} parent=1 // pred_region
      _
    $region13: #{tpu_custom_call.1} parent=1 // pred_fallthru
      _
    // Predicated region
    $region14: #{tpu_custom_call.1} parent=1 // pred_check
      _
    $region15: #{tpu_custom_call.1} parent=1 // pred_check_branch
      %37 = sbr.rel (0) target = $region17
    $region16: #{tpu_custom_call.1} parent=1 // pred_region
      _
    $region17: #{tpu_custom_call.1} parent=1 // pred_fallthru
      _
    // Predicated region
    $region18: #{tpu_custom_call.1} parent=1 // pred_check
      _
    $region19: #{tpu_custom_call.1} parent=1 // pred_check_branch
      %39 = sbr.rel (0) target = $region21
    $region20: #{tpu_custom_call.1} parent=1 // pred_region
      _
    $region21: #{tpu_custom_call.1} parent=1 // pred_fallthru
      _
    // Predicated region
    $region22: #{tpu_custom_call.1} parent=1 // pred_check
      _
    $region23: #{tpu_custom_call.1} parent=1 // pred_check_branch
      %41 = sbr.rel (0) target = $region25
    $region24: #{tpu_custom_call.1} parent=1 // pred_region
      _
    $region25: #{tpu_custom_call.1} parent=1 // pred_fallthru
      _
    // Predicated region
    $region26: #{tpu_custom_call.1} parent=1 // pred_check
      _
    $region27: #{tpu_custom_call.1} parent=1 // pred_check_branch
      %43 = sbr.rel (0) target = $region29
    $region28: #{tpu_custom_call.1} parent=1 // pred_region
      _
    $region29: #{tpu_custom_call.1} parent=1 // pred_fallthru
      _
    // Predicated region
    $region30: #{tpu_custom_call.1} parent=1 // pred_check
      _
    $region31: #{tpu_custom_call.1} parent=1 // pred_check_branch
      %45 = sbr.rel (0) target = $region33
    $region32: #{tpu_custom_call.1} parent=1 // pred_region
      _
    $region33: #{tpu_custom_call.1} parent=1 // pred_fallthru
      _
    // Predicated region
    $region34: #{tpu_custom_call.1} parent=1 // pred_check
      _
    $region35: #{tpu_custom_call.1} parent=1 // pred_check_branch
      %47 = sbr.rel (0) target = $region37
    $region36: #{tpu_custom_call.1} parent=1 // pred_region
      _
    $region37: #{tpu_custom_call.1} parent=1 // pred_fallthru
      _
    // Predicated region
    $region38: #{tpu_custom_call.1} parent=1 // pred_check
      _
    $region39: #{tpu_custom_call.1} parent=1 // pred_check_branch
      %49 = sbr.rel (0) target = $region41
    $region40: #{tpu_custom_call.1} parent=1 // pred_region
      _
    $region41: #{tpu_custom_call.1} parent=1 // pred_fallthru
      _
    // Predicated region
    $region42: #{tpu_custom_call.1} parent=1 // pred_check
      _
    $region43: #{tpu_custom_call.1} parent=1 // pred_check_branch
      %51 = sbr.rel (0) target = $region45
    $region44: #{tpu_custom_call.1} parent=1 // pred_region
      _
    $region45: #{tpu_custom_call.1} parent=1 // pred_fallthru
      _
    // Predicated region
    $region46: #{tpu_custom_call.1} parent=1 // pred_check
      _
    $region47: #{tpu_custom_call.1} parent=1 // pred_check_branch
      %53 = sbr.rel (0) target = $region49
    $region48: #{tpu_custom_call.1} parent=1 // pred_region
      _
    $region49: #{tpu_custom_call.1} parent=1 // pred_fallthru
      _
    // Predicated region
    $region50: #{tpu_custom_call.1} parent=1 // pred_check
      _
    $region51: #{tpu_custom_call.1} parent=1 // pred_check_branch
      %55 = sbr.rel (0) target = $region53
    $region52: #{tpu_custom_call.1} parent=1 // pred_region
      _
    $region53: #{tpu_custom_call.1} parent=1 // pred_fallthru
      _
    // Predicated region
    $region54: #{tpu_custom_call.1} parent=1 // pred_check
      _
    $region55: #{tpu_custom_call.1} parent=1 // pred_check_branch
      %57 = sbr.rel (0) target = $region57
    $region56: #{tpu_custom_call.1} parent=1 // pred_region
      _
    $region57: #{tpu_custom_call.1} parent=1 // pred_fallthru
      _
    // Predicated region
    $region58: #{tpu_custom_call.1} parent=1 // pred_check
      _
    $region59: #{tpu_custom_call.1} parent=1 // pred_check_branch
      %59 = sbr.rel (0) target = $region61
    $region60: #{tpu_custom_call.1} parent=1 // pred_region
      _
    $region61: #{tpu_custom_call.1} parent=1 // pred_fallthru
      _
    // Predicated region
    $region62: #{tpu_custom_call.1} parent=1 // pred_check
      _
    $region63: #{tpu_custom_call.1} parent=1 // pred_check_branch
      %61 = sbr.rel (0) target = $region65
    $region64: #{tpu_custom_call.1} parent=1 // pred_region
      _
    $region65: #{tpu_custom_call.1} parent=1 // pred_fallthru
      _
    // Predicated region
    $region66: #{tpu_custom_call.1} parent=1 // pred_check
      _
    $region67: #{tpu_custom_call.1} parent=1 // pred_check_branch
      %63 = sbr.rel (0) target = $region69
    $region68: #{tpu_custom_call.1} parent=1 // pred_region
      _
    $region69: #{tpu_custom_call.1} parent=1 // pred_fallthru
      _
    // Predicated region
    $region70: #{tpu_custom_call.1} parent=1 // pred_check
      _
    $region71: #{tpu_custom_call.1} parent=1 // pred_check_branch
      %65 = sbr.rel (0) target = $region73
    $region72: #{tpu_custom_call.1} parent=1 // pred_region
      _
    $region73: #{tpu_custom_call.1} parent=1 // pred_fallthru
      _
    // Predicated region
    $region74: #{tpu_custom_call.1} parent=1 // pred_check
      _
    $region75: #{tpu_custom_call.1} parent=1 // pred_check_branch
      %67 = sbr.rel (0) target = $region77
    $region76: #{tpu_custom_call.1} parent=1 // pred_region
      _
    $region77: #{tpu_custom_call.1} parent=1 // pred_fallthru
      _
    // Predicated region
    $region78: #{tpu_custom_call.1} parent=1 // pred_check
      _
    $region79: #{tpu_custom_call.1} parent=1 // pred_check_branch
      %69 = sbr.rel (0) target = $region81
    $region80: #{tpu_custom_call.1} parent=1 // pred_region
      _
    $region81: #{tpu_custom_call.1} parent=1 // pred_fallthru
      _
    %v70 = vld [vmem:[%s1] sm:$0xff]
    %v71 = vld [vmem:[%s2] sm:$0xff]
    %v72 = vld [vmem:[%s2 + $0x8] sm:$0xff]
    %v73 = vld [vmem:[%s2 + $0x10] sm:$0xff]
    %v74 = vld [vmem:[%s2 + $0x18] sm:$0xff]
    %v75 = vld [vmem:[%s2 + $0x20] sm:$0xff]
    %v76 = vld [vmem:[%s2 + $0x28] sm:$0xff]
    %v77 = vld [vmem:[%s2 + $0x30] sm:$0xff]
    %v78 = vld [vmem:[%s2 + $0x38] sm:$0xff]
    %v79 = vld [vmem:[%s3] sm:$0xff]
    %v80 = vld [vmem:[%s3 + $0x8] sm:$0xff]
    %v81 = vld [vmem:[%s3 + $0x10] sm:$0xff]
    %v82 = vld [vmem:[%s3 + $0x18] sm:$0xff]
    %v83 = vld [vmem:[%s3 + $0x20] sm:$0xff]
    %v84 = vld [vmem:[%s3 + $0x28] sm:$0xff]
    %v85 = vld [vmem:[%s3 + $0x30] sm:$0xff]
    %v86 = vld [vmem:[%s3 + $0x38] sm:$0xff]
    %v87 = vld [vmem:[%s4] sm:$0xff]
    %v88 = vld [vmem:[%s4 + $0x8] sm:$0xff]
    %v89 = vld [vmem:[%s4 + $0x10] sm:$0xff]
    %v90 = vld [vmem:[%s4 + $0x18] sm:$0xff]
    %v91 = vld [vmem:[%s4 + $0x20] sm:$0xff]
    %v92 = vld [vmem:[%s4 + $0x28] sm:$0xff]
    %v93 = vld [vmem:[%s4 + $0x30] sm:$0xff]
    %v94 = vld [vmem:[%s4 + $0x38] sm:$0xff]
    %v95 = vld [vmem:[%s7] sm:$0xff]
    %v96 = vld [vmem:[%s7 + $0x8] sm:$0xff]
    %v97 = vld [vmem:[%s8] sm:$0x1]
    %v99 = vperm.slane %v97, 0
    %vm101 = vcmask 130048
    %v103 = vsel %vm101, %v70, 0
    %105 = vmatpush.msra.mxu0 0.0
    %106 = vmatpush.msra.mxu0 0.0
    %107 = vmatpush.msra.mxu0 0.0
    %108 = vmatpush.msra.mxu0 0.0
    %109 = vmatpush.msra.mxu0 0.0
    %110 = vmatpush.msra.mxu0 0.0
    %111 = vmatpush.msra.mxu0 0.0
    %112 = vmatpush.msra.mxu0 0.0
    %113 = vmatpush.msra.mxu0 0.0
    %114 = vmatpush.msra.mxu0 0.0
    %115 = vmatpush.msra.mxu0 0.0
    %116 = vmatpush.msra.mxu0 0.0
    %117 = vmatpush.msra.mxu0 0.0
    %118 = vmatpush.msra.mxu0 0.0
    %119 = vmatpush.msra.mxu0 %v96
    %120 = vmatpush.msra.mxu0 %v95
    %121 = vmatmul.f32.gmra.mxu0 %v103
    %v122 = vpop.f32.mrf.mxu0
    %v123 = vadd.f32 %v99, %v122
    %124 = vdwg.mxu0
    %v125 = vld [vmem:[%s5] sm:$0x1]
    %127 = vset.pattern.permute.xlu0 0
    %128 = vperm.xlu0 %127, %v87
    %v129 = vpop.permute.xlu0 %128
    %132 = vset.pattern.permute.xlu0 0
    %133 = vperm.xlu0 %132, %v88
    %v134 = vpop.permute.xlu0 %133
    %137 = vset.pattern.permute.xlu0 0
    %138 = vperm.xlu0 %137, %v89
    %v139 = vpop.permute.xlu0 %138
    %142 = vset.pattern.permute.xlu0 0
    %143 = vperm.xlu0 %142, %v90
    %v144 = vpop.permute.xlu0 %143
    %147 = vset.pattern.permute.xlu0 0
    %148 = vperm.xlu0 %147, %v91
    %v149 = vpop.permute.xlu0 %148
    %152 = vset.pattern.permute.xlu0 0
    %153 = vperm.xlu0 %152, %v92
    %v154 = vpop.permute.xlu0 %153
    %157 = vset.pattern.permute.xlu0 0
    %158 = vperm.xlu0 %157, %v93
    %v159 = vpop.permute.xlu0 %158
    %162 = vset.pattern.permute.xlu0 0
    %163 = vperm.xlu0 %162, %v94
    %v164 = vpop.permute.xlu0 %163
    %v167 = vperm.slane %v125, 0
    %v169 = vmul.f32 %v129, %v167
    %v170 = vmul.f32 %v134, %v167
    %v171 = vmul.f32 %v139, %v167
    %v172 = vmul.f32 %v144, %v167
    %v173 = vmul.f32 %v149, %v167
    %v174 = vmul.f32 %v154, %v167
    %v175 = vmul.f32 %v159, %v167
    %v176 = vmul.f32 %v164, %v167
    %v177 = vld [vmem:[%s6] sm:$0x1]
    %v179 = vperm.slane %v177, 0
    %v181 = vadd.f32 %v169, %v179
    %v182 = vadd.f32 %v170, %v179
    %v183 = vadd.f32 %v171, %v179
    %v184 = vadd.f32 %v172, %v179
    %v185 = vadd.f32 %v173, %v179
    %v186 = vadd.f32 %v174, %v179
    %v187 = vadd.f32 %v175, %v179
    %v188 = vadd.f32 %v176, %v179
    %v189 = vand.u32 2147483647, %v181
    %vm190 = vcmp.le.f32.partialorder %v189, 0.7853982
    %vm191 = vcmp.lt.s32.totalorder %v181, 0
    %v192 = vand.u32 %v181, 2139095040
    %v193 = vshrl.u32 %v192, 23
    %v194 = vsub.s32 %v193, 127
    %v195 = vand.u32 2147483647, %v181
    %v196 = vand.u32 %v195, 8388607
    %v197 = vor.u32 %v196, 8388608
    %v198 = vsub.s32 0, %v197
    %v199 = vadd.s32 %v194, 1
    %vm200 = vcmp.gt.s32.totalorder %v199, 0
    %v201 = vsel %vm200, %v199, 0
    %v202 = vshrl.u32 %v201, 5
    %v203 = vand.u32 %v201, 31
    %v204 = vsub.s32 32, %v203
    %v205 = vshrl.u32 683565275, %v204
    %v206 = vshll.u32 683565275, %v203
    %v207 = vshrl.u32 2475754826, %v204
    %v208 = vor.u32 %v206, %v207
    %v209 = vshll.u32 2475754826, %v203
    %v210 = vshrl.u32 2131351028, %v204
    %v211 = vor.u32 %v209, %v210
    %v212 = vshll.u32 2131351028, %v203
    %v213 = vshrl.u32 2102212464, %v204
    %v214 = vor.u32 %v212, %v213
    %v215 = vshll.u32 2102212464, %v203
    %v216 = vshrl.u32 920167782, %v204
    %v217 = vor.u32 %v215, %v216
    %v218 = vshll.u32 920167782, %v203
    %v219 = vshrl.u32 1326507024, %v204
    %v220 = vor.u32 %v218, %v219
    %vm221 = vcmp.lt.s32.totalorder %v202, 1
    %vm222 = vcmp.lt.s32.totalorder %v202, 2
    %vm223 = vcmp.lt.s32.totalorder %v202, 3
    %vm224 = vcmp.lt.s32.totalorder %v202, 4
    %v225 = vsel %vm221, %v205, %v208
    %v226 = vsel %vm224, %v214, 2102212464
    %v227 = vsel %vm223, %v211, %v226
    %v228 = vsel %vm222, %v225, %v227
    %v229 = vsel %vm221, %v208, %v211
    %v230 = vsel %vm224, %v217, 920167782
    %v231 = vsel %vm223, %v214, %v230
    %v232 = vsel %vm222, %v229, %v231
    %v233 = vsel %vm221, %v211, %v214
    %v234 = vsel %vm224, %v220, 1326507024
    %v235 = vsel %vm223, %v217, %v234
    %v236 = vsel %vm222, %v233, %v235
    %v237 = vshll.u32 %v197, 8
    %v238 = vand.u32 %v237, 65535
    %v239 = vshrl.u32 %v237, 16
    %v240 = vand.u32 %v236, 65535
    %v241 = vshrl.u32 %v236, 16
    %v242 = vmul.u32 %v238, %v240
    %v243 = vmul.u32 %v238, %v241
    %v244 = vmul.u32 %v239, %v240
    %v245 = vmul.u32 %v239, %v241
    %v246 = vshll.u32 %v243, 16
    %v247 = vshrl.u32 %v243, 16
    %v248 = vshll.u32 %v244, 16
    %v249 = vshrl.u32 %v244, 16
    %vm250 = vc.u32 %v242, %v246
    %v251 = vsel %vm250, 1, 0
    %v252 = vadd.s32 %v242, %v246
    %v253 = vadd.s32 %v245, %v251
    %vm254 = vc.u32 %v252, %v248
    %v255 = vsel %vm254, 1, 0
    %v256 = vadd.s32 %v252, %v248
    %v257 = vadd.s32 %v253, %v255
    %v258 = vadd.s32 %v257, %v247
    %v259 = vadd.s32 %v258, %v249
    %v260 = vand.u32 %v237, 65535
    %v261 = vshrl.u32 %v237, 16
    %v262 = vand.u32 %v232, 65535
    %v263 = vshrl.u32 %v232, 16
    %v264 = vmul.u32 %v260, %v262
    %v265 = vmul.u32 %v260, %v263
    %v266 = vmul.u32 %v261, %v262
    %v267 = vmul.u32 %v261, %v263
    %v268 = vshll.u32 %v265, 16
    %v269 = vshrl.u32 %v265, 16
    %v270 = vshll.u32 %v266, 16
    %v271 = vshrl.u32 %v266, 16
    %vm272 = vc.u32 %v264, %v268
    %v273 = vsel %vm272, 1, 0
    %v274 = vadd.s32 %v264, %v268
    %v275 = vadd.s32 %v267, %v273
    %vm276 = vc.u32 %v274, %v270
    %v277 = vsel %vm276, 1, 0
    %v278 = vadd.s32 %v274, %v270
    %v279 = vadd.s32 %v275, %v277
    %v280 = vadd.s32 %v279, %v269
    %v281 = vadd.s32 %v280, %v271
    %v282 = vmul.u32 %v237, %v228
    %v283 = vadd.s32 %v259, %v278
    %vm284 = vc.u32 %v259, %v278
    %v285 = vadd.s32 %v281, 1
    %v286 = vsel %vm284, %v285, %v281
    %v287 = vadd.s32 %v282, %v286
    %v288 = vadd.s32 %v287, 536870912
    %v289 = vshrl.u32 %v288, 30
    %v290 = vshll.u32 %v289, 30
    %v291 = vsub.s32 %v287, %v290
    %vm292 = vcmp.lt.s32.totalorder %v291, 0
    %v293 = vsub.s32 0, %v291
    %v294 = vsel %vm292, %v293, %v291
    %v295 = vclz %v294
    %v296 = vsub.s32 %v295, 2
    %vm297 = vcmp.gt.s32.totalorder 0, %v296
    %v298 = vsel %vm297, 0, %v296
    %v299 = vsub.s32 32, %v298
    %v300 = vshll.u32 %v291, %v298
    %v301 = vshrl.u32 %v283, %v299
    %v302 = vor.u32 %v300, %v301
    %v303 = vsub.s32 4294967266, %v298
    %v304 = vadd.s32 %v303, 127
    %v305 = vshll.u32 %v304, 23
    %v306 = vor.u32 4788187, %v305
    %v307 = vand.u32 2147483647, %v306
    %v309 = vcvt.s32.f32 %v302
    %v310 = vmul.f32 %v309, %v307
    %v311 = vxor.u32 %v310, 2147483648
    %v312 = vsel %vm191, %v311, %v310
    %v313 = vsub.s32 4, %v289
    %v314 = vsel %vm191, %v313, %v289
    %v315 = vsel %vm190, %v181, %v312
    %v316 = vsel %vm190, 0, %v314
    %v317 = vmul.f32 %v315, %v315
    %v318 = vmul.f32 %v317, -0.001358992
    %v319 = vadd.f32 %v318, 0.041655596
    %v320 = vmul.f32 %v317, %v319
    %v321 = vadd.f32 %v320, -0.4999988
    %v322 = vmul.f32 %v317, %v321
    %v323 = vadd.f32 1.0, %v322
    %v324 = vmul.f32 %v315, %v315
    %v325 = vmul.f32 %v324, -0.00019511016
    %v326 = vadd.f32 %v325, 0.008332121
    %v327 = vmul.f32 %v324, %v326
    %v328 = vadd.f32 %v327, -0.16666654
    %v329 = vmul.f32 %v324, %v328
    %v330 = vadd.f32 %v329, 1.0
    %v331 = vmul.f32 %v330, %v315
    %vm332 = vweird.f32 %v181
    %v333 = vand.u32 %v316, 3
    %vm334 = vcmp.lt.s32.totalorder %v333, 2
    %vm335 = vcmp.eq.s32.totalorder %v333, 0
    %v336 = vxor.u32 %v331, 2147483648
    %v337 = vsel %vm335, %v323, %v336
    %vm338 = vcmp.eq.s32.totalorder %v333, 2
    %v339 = vxor.u32 %v323, 2147483648
    %v340 = vsel %vm338, %v339, %v331
    %v341 = vsel %vm334, %v337, %v340
    %v342 = vsel %vm332, nan, %v341
    %v343 = vand.u32 2147483647, %v182
    %vm344 = vcmp.le.f32.partialorder %v343, 0.7853982
    %vm345 = vcmp.lt.s32.totalorder %v182, 0
    %v346 = vand.u32 %v182, 2139095040
    %v347 = vshrl.u32 %v346, 23
    %v348 = vsub.s32 %v347, 127
    %v349 = vand.u32 2147483647, %v182
    %v350 = vand.u32 %v349, 8388607
    %v351 = vor.u32 %v350, 8388608
    %v352 = vsub.s32 0, %v351
    %v353 = vadd.s32 %v348, 1
    %vm354 = vcmp.gt.s32.totalorder %v353, 0
    %v355 = vsel %vm354, %v353, 0
    %v356 = vshrl.u32 %v355, 5
    %v357 = vand.u32 %v355, 31
    %v358 = vsub.s32 32, %v357
    %v359 = vshrl.u32 683565275, %v358
    %v360 = vshll.u32 683565275, %v357
    %v361 = vshrl.u32 2475754826, %v358
    %v362 = vor.u32 %v360, %v361
    %v363 = vshll.u32 2475754826, %v357
    %v364 = vshrl.u32 2131351028, %v358
    %v365 = vor.u32 %v363, %v364
    %v366 = vshll.u32 2131351028, %v357
    %v367 = vshrl.u32 2102212464, %v358
    %v368 = vor.u32 %v366, %v367
    %v369 = vshll.u32 2102212464, %v357
    %v370 = vshrl.u32 920167782, %v358
    %v371 = vor.u32 %v369, %v370
    %v372 = vshll.u32 920167782, %v357
    %v373 = vshrl.u32 1326507024, %v358
    %v374 = vor.u32 %v372, %v373
    %vm375 = vcmp.lt.s32.totalorder %v356, 1
    %vm376 = vcmp.lt.s32.totalorder %v356, 2
    %vm377 = vcmp.lt.s32.totalorder %v356, 3
    %vm378 = vcmp.lt.s32.totalorder %v356, 4
    %v379 = vsel %vm375, %v359, %v362
    %v380 = vsel %vm378, %v368, 2102212464
    %v381 = vsel %vm377, %v365, %v380
    %v382 = vsel %vm376, %v379, %v381
    %v383 = vsel %vm375, %v362, %v365
    %v384 = vsel %vm378, %v371, 920167782
    %v385 = vsel %vm377, %v368, %v384
    %v386 = vsel %vm376, %v383, %v385
    %v387 = vsel %vm375, %v365, %v368
    %v388 = vsel %vm378, %v374, 1326507024
    %v389 = vsel %vm377, %v371, %v388
    %v390 = vsel %vm376, %v387, %v389
    %v391 = vshll.u32 %v351, 8
    %v392 = vand.u32 %v391, 65535
    %v393 = vshrl.u32 %v391, 16
    %v394 = vand.u32 %v390, 65535
    %v395 = vshrl.u32 %v390, 16
    %v396 = vmul.u32 %v392, %v394
    %v397 = vmul.u32 %v392, %v395
    %v398 = vmul.u32 %v393, %v394
    %v399 = vmul.u32 %v393, %v395
    %v400 = vshll.u32 %v397, 16
    %v401 = vshrl.u32 %v397, 16
    %v402 = vshll.u32 %v398, 16
    %v403 = vshrl.u32 %v398, 16
    %vm404 = vc.u32 %v396, %v400
    %v405 = vsel %vm404, 1, 0
    %v406 = vadd.s32 %v396, %v400
    %v407 = vadd.s32 %v399, %v405
    %vm408 = vc.u32 %v406, %v402
    %v409 = vsel %vm408, 1, 0
    %v410 = vadd.s32 %v406, %v402
    %v411 = vadd.s32 %v407, %v409
    %v412 = vadd.s32 %v411, %v401
    %v413 = vadd.s32 %v412, %v403
    %v414 = vand.u32 %v391, 65535
    %v415 = vshrl.u32 %v391, 16
    %v416 = vand.u32 %v386, 65535
    %v417 = vshrl.u32 %v386, 16
    %v418 = vmul.u32 %v414, %v416
    %v419 = vmul.u32 %v414, %v417
    %v420 = vmul.u32 %v415, %v416
    %v421 = vmul.u32 %v415, %v417
    %v422 = vshll.u32 %v419, 16
    %v423 = vshrl.u32 %v419, 16
    %v424 = vshll.u32 %v420, 16
    %v425 = vshrl.u32 %v420, 16
    %vm426 = vc.u32 %v418, %v422
    %v427 = vsel %vm426, 1, 0
    %v428 = vadd.s32 %v418, %v422
    %v429 = vadd.s32 %v421, %v427
    %vm430 = vc.u32 %v428, %v424
    %v431 = vsel %vm430, 1, 0
    %v432 = vadd.s32 %v428, %v424
    %v433 = vadd.s32 %v429, %v431
    %v434 = vadd.s32 %v433, %v423
    %v435 = vadd.s32 %v434, %v425
    %v436 = vmul.u32 %v391, %v382
    %v437 = vadd.s32 %v413, %v432
    %vm438 = vc.u32 %v413, %v432
    %v439 = vadd.s32 %v435, 1
    %v440 = vsel %vm438, %v439, %v435
    %v441 = vadd.s32 %v436, %v440
    %v442 = vadd.s32 %v441, 536870912
    %v443 = vshrl.u32 %v442, 30
    %v444 = vshll.u32 %v443, 30
    %v445 = vsub.s32 %v441, %v444
    %vm446 = vcmp.lt.s32.totalorder %v445, 0
    %v447 = vsub.s32 0, %v445
    %v448 = vsel %vm446, %v447, %v445
    %v449 = vclz %v448
    %v450 = vsub.s32 %v449, 2
    %vm451 = vcmp.gt.s32.totalorder 0, %v450
    %v452 = vsel %vm451, 0, %v450
    %v453 = vsub.s32 32, %v452
    %v454 = vshll.u32 %v445, %v452
    %v455 = vshrl.u32 %v437, %v453
    %v456 = vor.u32 %v454, %v455
    %v457 = vsub.s32 4294967266, %v452
    %v458 = vadd.s32 %v457, 127
    %v459 = vshll.u32 %v458, 23
    %v460 = vor.u32 4788187, %v459
    %v461 = vand.u32 2147483647, %v460
    %v463 = vcvt.s32.f32 %v456
    %v464 = vmul.f32 %v463, %v461
    %v465 = vxor.u32 %v464, 2147483648
    %v466 = vsel %vm345, %v465, %v464
    %v467 = vsub.s32 4, %v443
    %v468 = vsel %vm345, %v467, %v443
    %v469 = vsel %vm344, %v182, %v466
    %v470 = vsel %vm344, 0, %v468
    %v471 = vmul.f32 %v469, %v469
    %v472 = vmul.f32 %v471, -0.001358992
    %v473 = vadd.f32 %v472, 0.041655596
    %v474 = vmul.f32 %v471, %v473
    %v475 = vadd.f32 %v474, -0.4999988
    %v476 = vmul.f32 %v471, %v475
    %v477 = vadd.f32 1.0, %v476
    %v478 = vmul.f32 %v469, %v469
    %v479 = vmul.f32 %v478, -0.00019511016
    %v480 = vadd.f32 %v479, 0.008332121
    %v481 = vmul.f32 %v478, %v480
    %v482 = vadd.f32 %v481, -0.16666654
    %v483 = vmul.f32 %v478, %v482
    %v484 = vadd.f32 %v483, 1.0
    %v485 = vmul.f32 %v484, %v469
    %vm486 = vweird.f32 %v182
    %v487 = vand.u32 %v470, 3
    %vm488 = vcmp.lt.s32.totalorder %v487, 2
    %vm489 = vcmp.eq.s32.totalorder %v487, 0
    %v490 = vxor.u32 %v485, 2147483648
    %v491 = vsel %vm489, %v477, %v490
    %vm492 = vcmp.eq.s32.totalorder %v487, 2
    %v493 = vxor.u32 %v477, 2147483648
    %v494 = vsel %vm492, %v493, %v485
    %v495 = vsel %vm488, %v491, %v494
    %v496 = vsel %vm486, nan, %v495
    %v497 = vand.u32 2147483647, %v183
    %vm498 = vcmp.le.f32.partialorder %v497, 0.7853982
    %vm499 = vcmp.lt.s32.totalorder %v183, 0
    %v500 = vand.u32 %v183, 2139095040
    %v501 = vshrl.u32 %v500, 23
    %v502 = vsub.s32 %v501, 127
    %v503 = vand.u32 2147483647, %v183
    %v504 = vand.u32 %v503, 8388607
    %v505 = vor.u32 %v504, 8388608
    %v506 = vsub.s32 0, %v505
    %v507 = vadd.s32 %v502, 1
    %vm508 = vcmp.gt.s32.totalorder %v507, 0
    %v509 = vsel %vm508, %v507, 0
    %v510 = vshrl.u32 %v509, 5
    %v511 = vand.u32 %v509, 31
    %v512 = vsub.s32 32, %v511
    %v513 = vshrl.u32 683565275, %v512
    %v514 = vshll.u32 683565275, %v511
    %v515 = vshrl.u32 2475754826, %v512
    %v516 = vor.u32 %v514, %v515
    %v517 = vshll.u32 2475754826, %v511
    %v518 = vshrl.u32 2131351028, %v512
    %v519 = vor.u32 %v517, %v518
    %v520 = vshll.u32 2131351028, %v511
    %v521 = vshrl.u32 2102212464, %v512
    %v522 = vor.u32 %v520, %v521
    %v523 = vshll.u32 2102212464, %v511
    %v524 = vshrl.u32 920167782, %v512
    %v525 = vor.u32 %v523, %v524
    %v526 = vshll.u32 920167782, %v511
    %v527 = vshrl.u32 1326507024, %v512
    %v528 = vor.u32 %v526, %v527
    %vm529 = vcmp.lt.s32.totalorder %v510, 1
    %vm530 = vcmp.lt.s32.totalorder %v510, 2
    %vm531 = vcmp.lt.s32.totalorder %v510, 3
    %vm532 = vcmp.lt.s32.totalorder %v510, 4
    %v533 = vsel %vm529, %v513, %v516
    %v534 = vsel %vm532, %v522, 2102212464
    %v535 = vsel %vm531, %v519, %v534
    %v536 = vsel %vm530, %v533, %v535
    %v537 = vsel %vm529, %v516, %v519
    %v538 = vsel %vm532, %v525, 920167782
    %v539 = vsel %vm531, %v522, %v538
    %v540 = vsel %vm530, %v537, %v539
    %v541 = vsel %vm529, %v519, %v522
    %v542 = vsel %vm532, %v528, 1326507024
    %v543 = vsel %vm531, %v525, %v542
    %v544 = vsel %vm530, %v541, %v543
    %v545 = vshll.u32 %v505, 8
    %v546 = vand.u32 %v545, 65535
    %v547 = vshrl.u32 %v545, 16
    %v548 = vand.u32 %v544, 65535
    %v549 = vshrl.u32 %v544, 16
    %v550 = vmul.u32 %v546, %v548
    %v551 = vmul.u32 %v546, %v549
    %v552 = vmul.u32 %v547, %v548
    %v553 = vmul.u32 %v547, %v549
    %v554 = vshll.u32 %v551, 16
    %v555 = vshrl.u32 %v551, 16
    %v556 = vshll.u32 %v552, 16
    %v557 = vshrl.u32 %v552, 16
    %vm558 = vc.u32 %v550, %v554
    %v559 = vsel %vm558, 1, 0
    %v560 = vadd.s32 %v550, %v554
    %v561 = vadd.s32 %v553, %v559
    %vm562 = vc.u32 %v560, %v556
    %v563 = vsel %vm562, 1, 0
    %v564 = vadd.s32 %v560, %v556
    %v565 = vadd.s32 %v561, %v563
    %v566 = vadd.s32 %v565, %v555
    %v567 = vadd.s32 %v566, %v557
    %v568 = vand.u32 %v545, 65535
    %v569 = vshrl.u32 %v545, 16
    %v570 = vand.u32 %v540, 65535
    %v571 = vshrl.u32 %v540, 16
    %v572 = vmul.u32 %v568, %v570
    %v573 = vmul.u32 %v568, %v571
    %v574 = vmul.u32 %v569, %v570
    %v575 = vmul.u32 %v569, %v571
    %v576 = vshll.u32 %v573, 16
    %v577 = vshrl.u32 %v573, 16
    %v578 = vshll.u32 %v574, 16
    %v579 = vshrl.u32 %v574, 16
    %vm580 = vc.u32 %v572, %v576
    %v581 = vsel %vm580, 1, 0
    %v582 = vadd.s32 %v572, %v576
    %v583 = vadd.s32 %v575, %v581
    %vm584 = vc.u32 %v582, %v578
    %v585 = vsel %vm584, 1, 0
    %v586 = vadd.s32 %v582, %v578
    %v587 = vadd.s32 %v583, %v585
    %v588 = vadd.s32 %v587, %v577
    %v589 = vadd.s32 %v588, %v579
    %v590 = vmul.u32 %v545, %v536
    %v591 = vadd.s32 %v567, %v586
    %vm592 = vc.u32 %v567, %v586
    %v593 = vadd.s32 %v589, 1
    %v594 = vsel %vm592, %v593, %v589
    %v595 = vadd.s32 %v590, %v594
    %v596 = vadd.s32 %v595, 536870912
    %v597 = vshrl.u32 %v596, 30
    %v598 = vshll.u32 %v597, 30
    %v599 = vsub.s32 %v595, %v598
    %vm600 = vcmp.lt.s32.totalorder %v599, 0
    %v601 = vsub.s32 0, %v599
    %v602 = vsel %vm600, %v601, %v599
    %v603 = vclz %v602
    %v604 = vsub.s32 %v603, 2
    %vm605 = vcmp.gt.s32.totalorder 0, %v604
    %v606 = vsel %vm605, 0, %v604
    %v607 = vsub.s32 32, %v606
    %v608 = vshll.u32 %v599, %v606
    %v609 = vshrl.u32 %v591, %v607
    %v610 = vor.u32 %v608, %v609
    %v611 = vsub.s32 4294967266, %v606
    %v612 = vadd.s32 %v611, 127
    %v613 = vshll.u32 %v612, 23
    %v614 = vor.u32 4788187, %v613
    %v615 = vand.u32 2147483647, %v614
    %v617 = vcvt.s32.f32 %v610
    %v618 = vmul.f32 %v617, %v615
    %v619 = vxor.u32 %v618, 2147483648
    %v620 = vsel %vm499, %v619, %v618
    %v621 = vsub.s32 4, %v597
    %v622 = vsel %vm499, %v621, %v597
    %v623 = vsel %vm498, %v183, %v620
    %v624 = vsel %vm498, 0, %v622
    %v625 = vmul.f32 %v623, %v623
    %v626 = vmul.f32 %v625, -0.001358992
    %v627 = vadd.f32 %v626, 0.041655596
    %v628 = vmul.f32 %v625, %v627
    %v629 = vadd.f32 %v628, -0.4999988
    %v630 = vmul.f32 %v625, %v629
    %v631 = vadd.f32 1.0, %v630
    %v632 = vmul.f32 %v623, %v623
    %v633 = vmul.f32 %v632, -0.00019511016
    %v634 = vadd.f32 %v633, 0.008332121
    %v635 = vmul.f32 %v632, %v634
    %v636 = vadd.f32 %v635, -0.16666654
    %v637 = vmul.f32 %v632, %v636
    %v638 = vadd.f32 %v637, 1.0
    %v639 = vmul.f32 %v638, %v623
    %vm640 = vweird.f32 %v183
    %v641 = vand.u32 %v624, 3
    %vm642 = vcmp.lt.s32.totalorder %v641, 2
    %vm643 = vcmp.eq.s32.totalorder %v641, 0
    %v644 = vxor.u32 %v639, 2147483648
    %v645 = vsel %vm643, %v631, %v644
    %vm646 = vcmp.eq.s32.totalorder %v641, 2
    %v647 = vxor.u32 %v631, 2147483648
    %v648 = vsel %vm646, %v647, %v639
    %v649 = vsel %vm642, %v645, %v648
    %v650 = vsel %vm640, nan, %v649
    %v651 = vand.u32 2147483647, %v184
    %vm652 = vcmp.le.f32.partialorder %v651, 0.7853982
    %vm653 = vcmp.lt.s32.totalorder %v184, 0
    %v654 = vand.u32 %v184, 2139095040
    %v655 = vshrl.u32 %v654, 23
    %v656 = vsub.s32 %v655, 127
    %v657 = vand.u32 2147483647, %v184
    %v658 = vand.u32 %v657, 8388607
    %v659 = vor.u32 %v658, 8388608
    %v660 = vsub.s32 0, %v659
    %v661 = vadd.s32 %v656, 1
    %vm662 = vcmp.gt.s32.totalorder %v661, 0
    %v663 = vsel %vm662, %v661, 0
    %v664 = vshrl.u32 %v663, 5
    %v665 = vand.u32 %v663, 31
    %v666 = vsub.s32 32, %v665
    %v667 = vshrl.u32 683565275, %v666
    %v668 = vshll.u32 683565275, %v665
    %v669 = vshrl.u32 2475754826, %v666
    %v670 = vor.u32 %v668, %v669
    %v671 = vshll.u32 2475754826, %v665
    %v672 = vshrl.u32 2131351028, %v666
    %v673 = vor.u32 %v671, %v672
    %v674 = vshll.u32 2131351028, %v665
    %v675 = vshrl.u32 2102212464, %v666
    %v676 = vor.u32 %v674, %v675
    %v677 = vshll.u32 2102212464, %v665
    %v678 = vshrl.u32 920167782, %v666
    %v679 = vor.u32 %v677, %v678
    %v680 = vshll.u32 920167782, %v665
    %v681 = vshrl.u32 1326507024, %v666
    %v682 = vor.u32 %v680, %v681
    %vm683 = vcmp.lt.s32.totalorder %v664, 1
    %vm684 = vcmp.lt.s32.totalorder %v664, 2
    %vm685 = vcmp.lt.s32.totalorder %v664, 3
    %vm686 = vcmp.lt.s32.totalorder %v664, 4
    %v687 = vsel %vm683, %v667, %v670
    %v688 = vsel %vm686, %v676, 2102212464
    %v689 = vsel %vm685, %v673, %v688
    %v690 = vsel %vm684, %v687, %v689
    %v691 = vsel %vm683, %v670, %v673
    %v692 = vsel %vm686, %v679, 920167782
    %v693 = vsel %vm685, %v676, %v692
    %v694 = vsel %vm684, %v691, %v693
    %v695 = vsel %vm683, %v673, %v676
    %v696 = vsel %vm686, %v682, 1326507024
    %v697 = vsel %vm685, %v679, %v696
    %v698 = vsel %vm684, %v695, %v697
    %v699 = vshll.u32 %v659, 8
    %v700 = vand.u32 %v699, 65535
    %v701 = vshrl.u32 %v699, 16
    %v702 = vand.u32 %v698, 65535
    %v703 = vshrl.u32 %v698, 16
    %v704 = vmul.u32 %v700, %v702
    %v705 = vmul.u32 %v700, %v703
    %v706 = vmul.u32 %v701, %v702
    %v707 = vmul.u32 %v701, %v703
    %v708 = vshll.u32 %v705, 16
    %v709 = vshrl.u32 %v705, 16
    %v710 = vshll.u32 %v706, 16
    %v711 = vshrl.u32 %v706, 16
    %vm712 = vc.u32 %v704, %v708
    %v713 = vsel %vm712, 1, 0
    %v714 = vadd.s32 %v704, %v708
    %v715 = vadd.s32 %v707, %v713
    %vm716 = vc.u32 %v714, %v710
    %v717 = vsel %vm716, 1, 0
    %v718 = vadd.s32 %v714, %v710
    %v719 = vadd.s32 %v715, %v717
    %v720 = vadd.s32 %v719, %v709
    %v721 = vadd.s32 %v720, %v711
    %v722 = vand.u32 %v699, 65535
    %v723 = vshrl.u32 %v699, 16
    %v724 = vand.u32 %v694, 65535
    %v725 = vshrl.u32 %v694, 16
    %v726 = vmul.u32 %v722, %v724
    %v727 = vmul.u32 %v722, %v725
    %v728 = vmul.u32 %v723, %v724
    %v729 = vmul.u32 %v723, %v725
    %v730 = vshll.u32 %v727, 16
    %v731 = vshrl.u32 %v727, 16
    %v732 = vshll.u32 %v728, 16
    %v733 = vshrl.u32 %v728, 16
    %vm734 = vc.u32 %v726, %v730
    %v735 = vsel %vm734, 1, 0
    %v736 = vadd.s32 %v726, %v730
    %v737 = vadd.s32 %v729, %v735
    %vm738 = vc.u32 %v736, %v732
    %v739 = vsel %vm738, 1, 0
    %v740 = vadd.s32 %v736, %v732
    %v741 = vadd.s32 %v737, %v739
    %v742 = vadd.s32 %v741, %v731
    %v743 = vadd.s32 %v742, %v733
    %v744 = vmul.u32 %v699, %v690
    %v745 = vadd.s32 %v721, %v740
    %vm746 = vc.u32 %v721, %v740
    %v747 = vadd.s32 %v743, 1
    %v748 = vsel %vm746, %v747, %v743
    %v749 = vadd.s32 %v744, %v748
    %v750 = vadd.s32 %v749, 536870912
    %v751 = vshrl.u32 %v750, 30
    %v752 = vshll.u32 %v751, 30
    %v753 = vsub.s32 %v749, %v752
    %vm754 = vcmp.lt.s32.totalorder %v753, 0
    %v755 = vsub.s32 0, %v753
    %v756 = vsel %vm754, %v755, %v753
    %v757 = vclz %v756
    %v758 = vsub.s32 %v757, 2
    %vm759 = vcmp.gt.s32.totalorder 0, %v758
    %v760 = vsel %vm759, 0, %v758
    %v761 = vsub.s32 32, %v760
    %v762 = vshll.u32 %v753, %v760
    %v763 = vshrl.u32 %v745, %v761
    %v764 = vor.u32 %v762, %v763
    %v765 = vsub.s32 4294967266, %v760
    %v766 = vadd.s32 %v765, 127
    %v767 = vshll.u32 %v766, 23
    %v768 = vor.u32 4788187, %v767
    %v769 = vand.u32 2147483647, %v768
    %v771 = vcvt.s32.f32 %v764
    %v772 = vmul.f32 %v771, %v769
    %v773 = vxor.u32 %v772, 2147483648
    %v774 = vsel %vm653, %v773, %v772
    %v775 = vsub.s32 4, %v751
    %v776 = vsel %vm653, %v775, %v751
    %v777 = vsel %vm652, %v184, %v774
    %v778 = vsel %vm652, 0, %v776
    %v779 = vmul.f32 %v777, %v777
    %v780 = vmul.f32 %v779, -0.001358992
    %v781 = vadd.f32 %v780, 0.041655596
    %v782 = vmul.f32 %v779, %v781
    %v783 = vadd.f32 %v782, -0.4999988
    %v784 = vmul.f32 %v779, %v783
    %v785 = vadd.f32 1.0, %v784
    %v786 = vmul.f32 %v777, %v777
    %v787 = vmul.f32 %v786, -0.00019511016
    %v788 = vadd.f32 %v787, 0.008332121
    %v789 = vmul.f32 %v786, %v788
    %v790 = vadd.f32 %v789, -0.16666654
    %v791 = vmul.f32 %v786, %v790
    %v792 = vadd.f32 %v791, 1.0
    %v793 = vmul.f32 %v792, %v777
    %vm794 = vweird.f32 %v184
    %v795 = vand.u32 %v778, 3
    %vm796 = vcmp.lt.s32.totalorder %v795, 2
    %vm797 = vcmp.eq.s32.totalorder %v795, 0
    %v798 = vxor.u32 %v793, 2147483648
    %v799 = vsel %vm797, %v785, %v798
    %vm800 = vcmp.eq.s32.totalorder %v795, 2
    %v801 = vxor.u32 %v785, 2147483648
    %v802 = vsel %vm800, %v801, %v793
    %v803 = vsel %vm796, %v799, %v802
    %v804 = vsel %vm794, nan, %v803
    %v805 = vand.u32 2147483647, %v185
    %vm806 = vcmp.le.f32.partialorder %v805, 0.7853982
    %vm807 = vcmp.lt.s32.totalorder %v185, 0
    %v808 = vand.u32 %v185, 2139095040
    %v809 = vshrl.u32 %v808, 23
    %v810 = vsub.s32 %v809, 127
    %v811 = vand.u32 2147483647, %v185
    %v812 = vand.u32 %v811, 8388607
    %v813 = vor.u32 %v812, 8388608
    %v814 = vsub.s32 0, %v813
    %v815 = vadd.s32 %v810, 1
    %vm816 = vcmp.gt.s32.totalorder %v815, 0
    %v817 = vsel %vm816, %v815, 0
    %v818 = vshrl.u32 %v817, 5
    %v819 = vand.u32 %v817, 31
    %v820 = vsub.s32 32, %v819
    %v821 = vshrl.u32 683565275, %v820
    %v822 = vshll.u32 683565275, %v819
    %v823 = vshrl.u32 2475754826, %v820
    %v824 = vor.u32 %v822, %v823
    %v825 = vshll.u32 2475754826, %v819
    %v826 = vshrl.u32 2131351028, %v820
    %v827 = vor.u32 %v825, %v826
    %v828 = vshll.u32 2131351028, %v819
    %v829 = vshrl.u32 2102212464, %v820
    %v830 = vor.u32 %v828, %v829
    %v831 = vshll.u32 2102212464, %v819
    %v832 = vshrl.u32 920167782, %v820
    %v833 = vor.u32 %v831, %v832
    %v834 = vshll.u32 920167782, %v819
    %v835 = vshrl.u32 1326507024, %v820
    %v836 = vor.u32 %v834, %v835
    %vm837 = vcmp.lt.s32.totalorder %v818, 1
    %vm838 = vcmp.lt.s32.totalorder %v818, 2
    %vm839 = vcmp.lt.s32.totalorder %v818, 3
    %vm840 = vcmp.lt.s32.totalorder %v818, 4
    %v841 = vsel %vm837, %v821, %v824
    %v842 = vsel %vm840, %v830, 2102212464
    %v843 = vsel %vm839, %v827, %v842
    %v844 = vsel %vm838, %v841, %v843
    %v845 = vsel %vm837, %v824, %v827
    %v846 = vsel %vm840, %v833, 920167782
    %v847 = vsel %vm839, %v830, %v846
    %v848 = vsel %vm838, %v845, %v847
    %v849 = vsel %vm837, %v827, %v830
    %v850 = vsel %vm840, %v836, 1326507024
    %v851 = vsel %vm839, %v833, %v850
    %v852 = vsel %vm838, %v849, %v851
    %v853 = vshll.u32 %v813, 8
    %v854 = vand.u32 %v853, 65535
    %v855 = vshrl.u32 %v853, 16
    %v856 = vand.u32 %v852, 65535
    %v857 = vshrl.u32 %v852, 16
    %v858 = vmul.u32 %v854, %v856
    %v859 = vmul.u32 %v854, %v857
    %v860 = vmul.u32 %v855, %v856
    %v861 = vmul.u32 %v855, %v857
    %v862 = vshll.u32 %v859, 16
    %v863 = vshrl.u32 %v859, 16
    %v864 = vshll.u32 %v860, 16
    %v865 = vshrl.u32 %v860, 16
    %vm866 = vc.u32 %v858, %v862
    %v867 = vsel %vm866, 1, 0
    %v868 = vadd.s32 %v858, %v862
    %v869 = vadd.s32 %v861, %v867
    %vm870 = vc.u32 %v868, %v864
    %v871 = vsel %vm870, 1, 0
    %v872 = vadd.s32 %v868, %v864
    %v873 = vadd.s32 %v869, %v871
    %v874 = vadd.s32 %v873, %v863
    %v875 = vadd.s32 %v874, %v865
    %v876 = vand.u32 %v853, 65535
    %v877 = vshrl.u32 %v853, 16
    %v878 = vand.u32 %v848, 65535
    %v879 = vshrl.u32 %v848, 16
    %v880 = vmul.u32 %v876, %v878
    %v881 = vmul.u32 %v876, %v879
    %v882 = vmul.u32 %v877, %v878
    %v883 = vmul.u32 %v877, %v879
    %v884 = vshll.u32 %v881, 16
    %v885 = vshrl.u32 %v881, 16
    %v886 = vshll.u32 %v882, 16
    %v887 = vshrl.u32 %v882, 16
    %vm888 = vc.u32 %v880, %v884
    %v889 = vsel %vm888, 1, 0
    %v890 = vadd.s32 %v880, %v884
    %v891 = vadd.s32 %v883, %v889
    %vm892 = vc.u32 %v890, %v886
    %v893 = vsel %vm892, 1, 0
    %v894 = vadd.s32 %v890, %v886
    %v895 = vadd.s32 %v891, %v893
    %v896 = vadd.s32 %v895, %v885
    %v897 = vadd.s32 %v896, %v887
    %v898 = vmul.u32 %v853, %v844
    %v899 = vadd.s32 %v875, %v894
    %vm900 = vc.u32 %v875, %v894
    %v901 = vadd.s32 %v897, 1
    %v902 = vsel %vm900, %v901, %v897
    %v903 = vadd.s32 %v898, %v902
    %v904 = vadd.s32 %v903, 536870912
    %v905 = vshrl.u32 %v904, 30
    %v906 = vshll.u32 %v905, 30
    %v907 = vsub.s32 %v903, %v906
    %vm908 = vcmp.lt.s32.totalorder %v907, 0
    %v909 = vsub.s32 0, %v907
    %v910 = vsel %vm908, %v909, %v907
    %v911 = vclz %v910
    %v912 = vsub.s32 %v911, 2
    %vm913 = vcmp.gt.s32.totalorder 0, %v912
    %v914 = vsel %vm913, 0, %v912
    %v915 = vsub.s32 32, %v914
    %v916 = vshll.u32 %v907, %v914
    %v917 = vshrl.u32 %v899, %v915
    %v918 = vor.u32 %v916, %v917
    %v919 = vsub.s32 4294967266, %v914
    %v920 = vadd.s32 %v919, 127
    %v921 = vshll.u32 %v920, 23
    %v922 = vor.u32 4788187, %v921
    %v923 = vand.u32 2147483647, %v922
    %v925 = vcvt.s32.f32 %v918
    %v926 = vmul.f32 %v925, %v923
    %v927 = vxor.u32 %v926, 2147483648
    %v928 = vsel %vm807, %v927, %v926
    %v929 = vsub.s32 4, %v905
    %v930 = vsel %vm807, %v929, %v905
    %v931 = vsel %vm806, %v185, %v928
    %v932 = vsel %vm806, 0, %v930
    %v933 = vmul.f32 %v931, %v931
    %v934 = vmul.f32 %v933, -0.001358992
    %v935 = vadd.f32 %v934, 0.041655596
    %v936 = vmul.f32 %v933, %v935
    %v937 = vadd.f32 %v936, -0.4999988
    %v938 = vmul.f32 %v933, %v937
    %v939 = vadd.f32 1.0, %v938
    %v940 = vmul.f32 %v931, %v931
    %v941 = vmul.f32 %v940, -0.00019511016
    %v942 = vadd.f32 %v941, 0.008332121
    %v943 = vmul.f32 %v940, %v942
    %v944 = vadd.f32 %v943, -0.16666654
    %v945 = vmul.f32 %v940, %v944
    %v946 = vadd.f32 %v945, 1.0
    %v947 = vmul.f32 %v946, %v931
    %vm948 = vweird.f32 %v185
    %v949 = vand.u32 %v932, 3
    %vm950 = vcmp.lt.s32.totalorder %v949, 2
    %vm951 = vcmp.eq.s32.totalorder %v949, 0
    %v952 = vxor.u32 %v947, 2147483648
    %v953 = vsel %vm951, %v939, %v952
    %vm954 = vcmp.eq.s32.totalorder %v949, 2
    %v955 = vxor.u32 %v939, 2147483648
    %v956 = vsel %vm954, %v955, %v947
    %v957 = vsel %vm950, %v953, %v956
    %v958 = vsel %vm948, nan, %v957
    %v959 = vand.u32 2147483647, %v186
    %vm960 = vcmp.le.f32.partialorder %v959, 0.7853982
    %vm961 = vcmp.lt.s32.totalorder %v186, 0
    %v962 = vand.u32 %v186, 2139095040
    %v963 = vshrl.u32 %v962, 23
    %v964 = vsub.s32 %v963, 127
    %v965 = vand.u32 2147483647, %v186
    %v966 = vand.u32 %v965, 8388607
    %v967 = vor.u32 %v966, 8388608
    %v968 = vsub.s32 0, %v967
    %v969 = vadd.s32 %v964, 1
    %vm970 = vcmp.gt.s32.totalorder %v969, 0
    %v971 = vsel %vm970, %v969, 0
    %v972 = vshrl.u32 %v971, 5
    %v973 = vand.u32 %v971, 31
    %v974 = vsub.s32 32, %v973
    %v975 = vshrl.u32 683565275, %v974
    %v976 = vshll.u32 683565275, %v973
    %v977 = vshrl.u32 2475754826, %v974
    %v978 = vor.u32 %v976, %v977
    %v979 = vshll.u32 2475754826, %v973
    %v980 = vshrl.u32 2131351028, %v974
    %v981 = vor.u32 %v979, %v980
    %v982 = vshll.u32 2131351028, %v973
    %v983 = vshrl.u32 2102212464, %v974
    %v984 = vor.u32 %v982, %v983
    %v985 = vshll.u32 2102212464, %v973
    %v986 = vshrl.u32 920167782, %v974
    %v987 = vor.u32 %v985, %v986
    %v988 = vshll.u32 920167782, %v973
    %v989 = vshrl.u32 1326507024, %v974
    %v990 = vor.u32 %v988, %v989
    %vm991 = vcmp.lt.s32.totalorder %v972, 1
    %vm992 = vcmp.lt.s32.totalorder %v972, 2
    %vm993 = vcmp.lt.s32.totalorder %v972, 3
    %vm994 = vcmp.lt.s32.totalorder %v972, 4
    %v995 = vsel %vm991, %v975, %v978
    %v996 = vsel %vm994, %v984, 2102212464
    %v997 = vsel %vm993, %v981, %v996
    %v998 = vsel %vm992, %v995, %v997
    %v999 = vsel %vm991, %v978, %v981
    %v1000 = vsel %vm994, %v987, 920167782
    %v1001 = vsel %vm993, %v984, %v1000
    %v1002 = vsel %vm992, %v999, %v1001
    %v1003 = vsel %vm991, %v981, %v984
    %v1004 = vsel %vm994, %v990, 1326507024
    %v1005 = vsel %vm993, %v987, %v1004
    %v1006 = vsel %vm992, %v1003, %v1005
    %v1007 = vshll.u32 %v967, 8
    %v1008 = vand.u32 %v1007, 65535
    %v1009 = vshrl.u32 %v1007, 16
    %v1010 = vand.u32 %v1006, 65535
    %v1011 = vshrl.u32 %v1006, 16
    %v1012 = vmul.u32 %v1008, %v1010
    %v1013 = vmul.u32 %v1008, %v1011
    %v1014 = vmul.u32 %v1009, %v1010
    %v1015 = vmul.u32 %v1009, %v1011
    %v1016 = vshll.u32 %v1013, 16
    %v1017 = vshrl.u32 %v1013, 16
    %v1018 = vshll.u32 %v1014, 16
    %v1019 = vshrl.u32 %v1014, 16
    %vm1020 = vc.u32 %v1012, %v1016
    %v1021 = vsel %vm1020, 1, 0
    %v1022 = vadd.s32 %v1012, %v1016
    %v1023 = vadd.s32 %v1015, %v1021
    %vm1024 = vc.u32 %v1022, %v1018
    %v1025 = vsel %vm1024, 1, 0
    %v1026 = vadd.s32 %v1022, %v1018
    %v1027 = vadd.s32 %v1023, %v1025
    %v1028 = vadd.s32 %v1027, %v1017
    %v1029 = vadd.s32 %v1028, %v1019
    %v1030 = vand.u32 %v1007, 65535
    %v1031 = vshrl.u32 %v1007, 16
    %v1032 = vand.u32 %v1002, 65535
    %v1033 = vshrl.u32 %v1002, 16
    %v1034 = vmul.u32 %v1030, %v1032
    %v1035 = vmul.u32 %v1030, %v1033
    %v1036 = vmul.u32 %v1031, %v1032
    %v1037 = vmul.u32 %v1031, %v1033
    %v1038 = vshll.u32 %v1035, 16
    %v1039 = vshrl.u32 %v1035, 16
    %v1040 = vshll.u32 %v1036, 16
    %v1041 = vshrl.u32 %v1036, 16
    %vm1042 = vc.u32 %v1034, %v1038
    %v1043 = vsel %vm1042, 1, 0
    %v1044 = vadd.s32 %v1034, %v1038
    %v1045 = vadd.s32 %v1037, %v1043
    %vm1046 = vc.u32 %v1044, %v1040
    %v1047 = vsel %vm1046, 1, 0
    %v1048 = vadd.s32 %v1044, %v1040
    %v1049 = vadd.s32 %v1045, %v1047
    %v1050 = vadd.s32 %v1049, %v1039
    %v1051 = vadd.s32 %v1050, %v1041
    %v1052 = vmul.u32 %v1007, %v998
    %v1053 = vadd.s32 %v1029, %v1048
    %vm1054 = vc.u32 %v1029, %v1048
    %v1055 = vadd.s32 %v1051, 1
    %v1056 = vsel %vm1054, %v1055, %v1051
    %v1057 = vadd.s32 %v1052, %v1056
    %v1058 = vadd.s32 %v1057, 536870912
    %v1059 = vshrl.u32 %v1058, 30
    %v1060 = vshll.u32 %v1059, 30
    %v1061 = vsub.s32 %v1057, %v1060
    %vm1062 = vcmp.lt.s32.totalorder %v1061, 0
    %v1063 = vsub.s32 0, %v1061
    %v1064 = vsel %vm1062, %v1063, %v1061
    %v1065 = vclz %v1064
    %v1066 = vsub.s32 %v1065, 2
    %vm1067 = vcmp.gt.s32.totalorder 0, %v1066
    %v1068 = vsel %vm1067, 0, %v1066
    %v1069 = vsub.s32 32, %v1068
    %v1070 = vshll.u32 %v1061, %v1068
    %v1071 = vshrl.u32 %v1053, %v1069
    %v1072 = vor.u32 %v1070, %v1071
    %v1073 = vsub.s32 4294967266, %v1068
    %v1074 = vadd.s32 %v1073, 127
    %v1075 = vshll.u32 %v1074, 23
    %v1076 = vor.u32 4788187, %v1075
    %v1077 = vand.u32 2147483647, %v1076
    %v1079 = vcvt.s32.f32 %v1072
    %v1080 = vmul.f32 %v1079, %v1077
    %v1081 = vxor.u32 %v1080, 2147483648
    %v1082 = vsel %vm961, %v1081, %v1080
    %v1083 = vsub.s32 4, %v1059
    %v1084 = vsel %vm961, %v1083, %v1059
    %v1085 = vsel %vm960, %v186, %v1082
    %v1086 = vsel %vm960, 0, %v1084
    %v1087 = vmul.f32 %v1085, %v1085
    %v1088 = vmul.f32 %v1087, -0.001358992
    %v1089 = vadd.f32 %v1088, 0.041655596
    %v1090 = vmul.f32 %v1087, %v1089
    %v1091 = vadd.f32 %v1090, -0.4999988
    %v1092 = vmul.f32 %v1087, %v1091
    %v1093 = vadd.f32 1.0, %v1092
    %v1094 = vmul.f32 %v1085, %v1085
    %v1095 = vmul.f32 %v1094, -0.00019511016
    %v1096 = vadd.f32 %v1095, 0.008332121
    %v1097 = vmul.f32 %v1094, %v1096
    %v1098 = vadd.f32 %v1097, -0.16666654
    %v1099 = vmul.f32 %v1094, %v1098
    %v1100 = vadd.f32 %v1099, 1.0
    %v1101 = vmul.f32 %v1100, %v1085
    %vm1102 = vweird.f32 %v186
    %v1103 = vand.u32 %v1086, 3
    %vm1104 = vcmp.lt.s32.totalorder %v1103, 2
    %vm1105 = vcmp.eq.s32.totalorder %v1103, 0
    %v1106 = vxor.u32 %v1101, 2147483648
    %v1107 = vsel %vm1105, %v1093, %v1106
    %vm1108 = vcmp.eq.s32.totalorder %v1103, 2
    %v1109 = vxor.u32 %v1093, 2147483648
    %v1110 = vsel %vm1108, %v1109, %v1101
    %v1111 = vsel %vm1104, %v1107, %v1110
    %v1112 = vsel %vm1102, nan, %v1111
    %v1113 = vand.u32 2147483647, %v187
    %vm1114 = vcmp.le.f32.partialorder %v1113, 0.7853982
    %vm1115 = vcmp.lt.s32.totalorder %v187, 0
    %v1116 = vand.u32 %v187, 2139095040
    %v1117 = vshrl.u32 %v1116, 23
    %v1118 = vsub.s32 %v1117, 127
    %v1119 = vand.u32 2147483647, %v187
    %v1120 = vand.u32 %v1119, 8388607
    %v1121 = vor.u32 %v1120, 8388608
    %v1122 = vsub.s32 0, %v1121
    %v1123 = vadd.s32 %v1118, 1
    %vm1124 = vcmp.gt.s32.totalorder %v1123, 0
    %v1125 = vsel %vm1124, %v1123, 0
    %v1126 = vshrl.u32 %v1125, 5
    %v1127 = vand.u32 %v1125, 31
    %v1128 = vsub.s32 32, %v1127
    %v1129 = vshrl.u32 683565275, %v1128
    %v1130 = vshll.u32 683565275, %v1127
    %v1131 = vshrl.u32 2475754826, %v1128
    %v1132 = vor.u32 %v1130, %v1131
    %v1133 = vshll.u32 2475754826, %v1127
    %v1134 = vshrl.u32 2131351028, %v1128
    %v1135 = vor.u32 %v1133, %v1134
    %v1136 = vshll.u32 2131351028, %v1127
    %v1137 = vshrl.u32 2102212464, %v1128
    %v1138 = vor.u32 %v1136, %v1137
    %v1139 = vshll.u32 2102212464, %v1127
    %v1140 = vshrl.u32 920167782, %v1128
    %v1141 = vor.u32 %v1139, %v1140
    %v1142 = vshll.u32 920167782, %v1127
    %v1143 = vshrl.u32 1326507024, %v1128
    %v1144 = vor.u32 %v1142, %v1143
    %vm1145 = vcmp.lt.s32.totalorder %v1126, 1
    %vm1146 = vcmp.lt.s32.totalorder %v1126, 2
    %vm1147 = vcmp.lt.s32.totalorder %v1126, 3
    %vm1148 = vcmp.lt.s32.totalorder %v1126, 4
    %v1149 = vsel %vm1145, %v1129, %v1132
    %v1150 = vsel %vm1148, %v1138, 2102212464
    %v1151 = vsel %vm1147, %v1135, %v1150
    %v1152 = vsel %vm1146, %v1149, %v1151
    %v1153 = vsel %vm1145, %v1132, %v1135
    %v1154 = vsel %vm1148, %v1141, 920167782
    %v1155 = vsel %vm1147, %v1138, %v1154
    %v1156 = vsel %vm1146, %v1153, %v1155
    %v1157 = vsel %vm1145, %v1135, %v1138
    %v1158 = vsel %vm1148, %v1144, 1326507024
    %v1159 = vsel %vm1147, %v1141, %v1158
    %v1160 = vsel %vm1146, %v1157, %v1159
    %v1161 = vshll.u32 %v1121, 8
    %v1162 = vand.u32 %v1161, 65535
    %v1163 = vshrl.u32 %v1161, 16
    %v1164 = vand.u32 %v1160, 65535
    %v1165 = vshrl.u32 %v1160, 16
    %v1166 = vmul.u32 %v1162, %v1164
    %v1167 = vmul.u32 %v1162, %v1165
    %v1168 = vmul.u32 %v1163, %v1164
    %v1169 = vmul.u32 %v1163, %v1165
    %v1170 = vshll.u32 %v1167, 16
    %v1171 = vshrl.u32 %v1167, 16
    %v1172 = vshll.u32 %v1168, 16
    %v1173 = vshrl.u32 %v1168, 16
    %vm1174 = vc.u32 %v1166, %v1170
    %v1175 = vsel %vm1174, 1, 0
    %v1176 = vadd.s32 %v1166, %v1170
    %v1177 = vadd.s32 %v1169, %v1175
    %vm1178 = vc.u32 %v1176, %v1172
    %v1179 = vsel %vm1178, 1, 0
    %v1180 = vadd.s32 %v1176, %v1172
    %v1181 = vadd.s32 %v1177, %v1179
    %v1182 = vadd.s32 %v1181, %v1171
    %v1183 = vadd.s32 %v1182, %v1173
    %v1184 = vand.u32 %v1161, 65535
    %v1185 = vshrl.u32 %v1161, 16
    %v1186 = vand.u32 %v1156, 65535
    %v1187 = vshrl.u32 %v1156, 16
    %v1188 = vmul.u32 %v1184, %v1186
    %v1189 = vmul.u32 %v1184, %v1187
    %v1190 = vmul.u32 %v1185, %v1186
    %v1191 = vmul.u32 %v1185, %v1187
    %v1192 = vshll.u32 %v1189, 16
    %v1193 = vshrl.u32 %v1189, 16
    %v1194 = vshll.u32 %v1190, 16
    %v1195 = vshrl.u32 %v1190, 16
    %vm1196 = vc.u32 %v1188, %v1192
    %v1197 = vsel %vm1196, 1, 0
    %v1198 = vadd.s32 %v1188, %v1192
    %v1199 = vadd.s32 %v1191, %v1197
    %vm1200 = vc.u32 %v1198, %v1194
    %v1201 = vsel %vm1200, 1, 0
    %v1202 = vadd.s32 %v1198, %v1194
    %v1203 = vadd.s32 %v1199, %v1201
    %v1204 = vadd.s32 %v1203, %v1193
    %v1205 = vadd.s32 %v1204, %v1195
    %v1206 = vmul.u32 %v1161, %v1152
    %v1207 = vadd.s32 %v1183, %v1202
    %vm1208 = vc.u32 %v1183, %v1202
    %v1209 = vadd.s32 %v1205, 1
    %v1210 = vsel %vm1208, %v1209, %v1205
    %v1211 = vadd.s32 %v1206, %v1210
    %v1212 = vadd.s32 %v1211, 536870912
    %v1213 = vshrl.u32 %v1212, 30
    %v1214 = vshll.u32 %v1213, 30
    %v1215 = vsub.s32 %v1211, %v1214
    %vm1216 = vcmp.lt.s32.totalorder %v1215, 0
    %v1217 = vsub.s32 0, %v1215
    %v1218 = vsel %vm1216, %v1217, %v1215
    %v1219 = vclz %v1218
    %v1220 = vsub.s32 %v1219, 2
    %vm1221 = vcmp.gt.s32.totalorder 0, %v1220
    %v1222 = vsel %vm1221, 0, %v1220
    %v1223 = vsub.s32 32, %v1222
    %v1224 = vshll.u32 %v1215, %v1222
    %v1225 = vshrl.u32 %v1207, %v1223
    %v1226 = vor.u32 %v1224, %v1225
    %v1227 = vsub.s32 4294967266, %v1222
    %v1228 = vadd.s32 %v1227, 127
    %v1229 = vshll.u32 %v1228, 23
    %v1230 = vor.u32 4788187, %v1229
    %v1231 = vand.u32 2147483647, %v1230
    %v1233 = vcvt.s32.f32 %v1226
    %v1234 = vmul.f32 %v1233, %v1231
    %v1235 = vxor.u32 %v1234, 2147483648
    %v1236 = vsel %vm1115, %v1235, %v1234
    %v1237 = vsub.s32 4, %v1213
    %v1238 = vsel %vm1115, %v1237, %v1213
    %v1239 = vsel %vm1114, %v187, %v1236
    %v1240 = vsel %vm1114, 0, %v1238
    %v1241 = vmul.f32 %v1239, %v1239
    %v1242 = vmul.f32 %v1241, -0.001358992
    %v1243 = vadd.f32 %v1242, 0.041655596
    %v1244 = vmul.f32 %v1241, %v1243
    %v1245 = vadd.f32 %v1244, -0.4999988
    %v1246 = vmul.f32 %v1241, %v1245
    %v1247 = vadd.f32 1.0, %v1246
    %v1248 = vmul.f32 %v1239, %v1239
    %v1249 = vmul.f32 %v1248, -0.00019511016
    %v1250 = vadd.f32 %v1249, 0.008332121
    %v1251 = vmul.f32 %v1248, %v1250
    %v1252 = vadd.f32 %v1251, -0.16666654
    %v1253 = vmul.f32 %v1248, %v1252
    %v1254 = vadd.f32 %v1253, 1.0
    %v1255 = vmul.f32 %v1254, %v1239
    %vm1256 = vweird.f32 %v187
    %v1257 = vand.u32 %v1240, 3
    %vm1258 = vcmp.lt.s32.totalorder %v1257, 2
    %vm1259 = vcmp.eq.s32.totalorder %v1257, 0
    %v1260 = vxor.u32 %v1255, 2147483648
    %v1261 = vsel %vm1259, %v1247, %v1260
    %vm1262 = vcmp.eq.s32.totalorder %v1257, 2
    %v1263 = vxor.u32 %v1247, 2147483648
    %v1264 = vsel %vm1262, %v1263, %v1255
    %v1265 = vsel %vm1258, %v1261, %v1264
    %v1266 = vsel %vm1256, nan, %v1265
    %v1267 = vand.u32 2147483647, %v188
    %vm1268 = vcmp.le.f32.partialorder %v1267, 0.7853982
    %vm1269 = vcmp.lt.s32.totalorder %v188, 0
    %v1270 = vand.u32 %v188, 2139095040
    %v1271 = vshrl.u32 %v1270, 23
    %v1272 = vsub.s32 %v1271, 127
    %v1273 = vand.u32 2147483647, %v188
    %v1274 = vand.u32 %v1273, 8388607
    %v1275 = vor.u32 %v1274, 8388608
    %v1276 = vsub.s32 0, %v1275
    %v1277 = vadd.s32 %v1272, 1
    %vm1278 = vcmp.gt.s32.totalorder %v1277, 0
    %v1279 = vsel %vm1278, %v1277, 0
    %v1280 = vshrl.u32 %v1279, 5
    %v1281 = vand.u32 %v1279, 31
    %v1282 = vsub.s32 32, %v1281
    %v1283 = vshrl.u32 683565275, %v1282
    %v1284 = vshll.u32 683565275, %v1281
    %v1285 = vshrl.u32 2475754826, %v1282
    %v1286 = vor.u32 %v1284, %v1285
    %v1287 = vshll.u32 2475754826, %v1281
    %v1288 = vshrl.u32 2131351028, %v1282
    %v1289 = vor.u32 %v1287, %v1288
    %v1290 = vshll.u32 2131351028, %v1281
    %v1291 = vshrl.u32 2102212464, %v1282
    %v1292 = vor.u32 %v1290, %v1291
    %v1293 = vshll.u32 2102212464, %v1281
    %v1294 = vshrl.u32 920167782, %v1282
    %v1295 = vor.u32 %v1293, %v1294
    %v1296 = vshll.u32 920167782, %v1281
    %v1297 = vshrl.u32 1326507024, %v1282
    %v1298 = vor.u32 %v1296, %v1297
    %vm1299 = vcmp.lt.s32.totalorder %v1280, 1
    %vm1300 = vcmp.lt.s32.totalorder %v1280, 2
    %vm1301 = vcmp.lt.s32.totalorder %v1280, 3
    %vm1302 = vcmp.lt.s32.totalorder %v1280, 4
    %v1303 = vsel %vm1299, %v1283, %v1286
    %v1304 = vsel %vm1302, %v1292, 2102212464
    %v1305 = vsel %vm1301, %v1289, %v1304
    %v1306 = vsel %vm1300, %v1303, %v1305
    %v1307 = vsel %vm1299, %v1286, %v1289
    %v1308 = vsel %vm1302, %v1295, 920167782
    %v1309 = vsel %vm1301, %v1292, %v1308
    %v1310 = vsel %vm1300, %v1307, %v1309
    %v1311 = vsel %vm1299, %v1289, %v1292
    %v1312 = vsel %vm1302, %v1298, 1326507024
    %v1313 = vsel %vm1301, %v1295, %v1312
    %v1314 = vsel %vm1300, %v1311, %v1313
    %v1315 = vshll.u32 %v1275, 8
    %v1316 = vand.u32 %v1315, 65535
    %v1317 = vshrl.u32 %v1315, 16
    %v1318 = vand.u32 %v1314, 65535
    %v1319 = vshrl.u32 %v1314, 16
    %v1320 = vmul.u32 %v1316, %v1318
    %v1321 = vmul.u32 %v1316, %v1319
    %v1322 = vmul.u32 %v1317, %v1318
    %v1323 = vmul.u32 %v1317, %v1319
    %v1324 = vshll.u32 %v1321, 16
    %v1325 = vshrl.u32 %v1321, 16
    %v1326 = vshll.u32 %v1322, 16
    %v1327 = vshrl.u32 %v1322, 16
    %vm1328 = vc.u32 %v1320, %v1324
    %v1329 = vsel %vm1328, 1, 0
    %v1330 = vadd.s32 %v1320, %v1324
    %v1331 = vadd.s32 %v1323, %v1329
    %vm1332 = vc.u32 %v1330, %v1326
    %v1333 = vsel %vm1332, 1, 0
    %v1334 = vadd.s32 %v1330, %v1326
    %v1335 = vadd.s32 %v1331, %v1333
    %v1336 = vadd.s32 %v1335, %v1325
    %v1337 = vadd.s32 %v1336, %v1327
    %v1338 = vand.u32 %v1315, 65535
    %v1339 = vshrl.u32 %v1315, 16
    %v1340 = vand.u32 %v1310, 65535
    %v1341 = vshrl.u32 %v1310, 16
    %v1342 = vmul.u32 %v1338, %v1340
    %v1343 = vmul.u32 %v1338, %v1341
    %v1344 = vmul.u32 %v1339, %v1340
    %v1345 = vmul.u32 %v1339, %v1341
    %v1346 = vshll.u32 %v1343, 16
    %v1347 = vshrl.u32 %v1343, 16
    %v1348 = vshll.u32 %v1344, 16
    %v1349 = vshrl.u32 %v1344, 16
    %vm1350 = vc.u32 %v1342, %v1346
    %v1351 = vsel %vm1350, 1, 0
    %v1352 = vadd.s32 %v1342, %v1346
    %v1353 = vadd.s32 %v1345, %v1351
    %vm1354 = vc.u32 %v1352, %v1348
    %v1355 = vsel %vm1354, 1, 0
    %v1356 = vadd.s32 %v1352, %v1348
    %v1357 = vadd.s32 %v1353, %v1355
    %v1358 = vadd.s32 %v1357, %v1347
    %v1359 = vadd.s32 %v1358, %v1349
    %v1360 = vmul.u32 %v1315, %v1306
    %v1361 = vadd.s32 %v1337, %v1356
    %vm1362 = vc.u32 %v1337, %v1356
    %v1363 = vadd.s32 %v1359, 1
    %v1364 = vsel %vm1362, %v1363, %v1359
    %v1365 = vadd.s32 %v1360, %v1364
    %v1366 = vadd.s32 %v1365, 536870912
    %v1367 = vshrl.u32 %v1366, 30
    %v1368 = vshll.u32 %v1367, 30
    %v1369 = vsub.s32 %v1365, %v1368
    %vm1370 = vcmp.lt.s32.totalorder %v1369, 0
    %v1371 = vsub.s32 0, %v1369
    %v1372 = vsel %vm1370, %v1371, %v1369
    %v1373 = vclz %v1372
    %v1374 = vsub.s32 %v1373, 2
    %vm1375 = vcmp.gt.s32.totalorder 0, %v1374
    %v1376 = vsel %vm1375, 0, %v1374
    %v1377 = vsub.s32 32, %v1376
    %v1378 = vshll.u32 %v1369, %v1376
    %v1379 = vshrl.u32 %v1361, %v1377
    %v1380 = vor.u32 %v1378, %v1379
    %v1381 = vsub.s32 4294967266, %v1376
    %v1382 = vadd.s32 %v1381, 127
    %v1383 = vshll.u32 %v1382, 23
    %v1384 = vor.u32 4788187, %v1383
    %v1385 = vand.u32 2147483647, %v1384
    %v1387 = vcvt.s32.f32 %v1380
    %v1388 = vmul.f32 %v1387, %v1385
    %v1389 = vxor.u32 %v1388, 2147483648
    %v1390 = vsel %vm1269, %v1389, %v1388
    %v1391 = vsub.s32 4, %v1367
    %v1392 = vsel %vm1269, %v1391, %v1367
    %v1393 = vsel %vm1268, %v188, %v1390
    %v1394 = vsel %vm1268, 0, %v1392
    %v1395 = vmul.f32 %v1393, %v1393
    %v1396 = vmul.f32 %v1395, -0.001358992
    %v1397 = vadd.f32 %v1396, 0.041655596
    %v1398 = vmul.f32 %v1395, %v1397
    %v1399 = vadd.f32 %v1398, -0.4999988
    %v1400 = vmul.f32 %v1395, %v1399
    %v1401 = vadd.f32 1.0, %v1400
    %v1402 = vmul.f32 %v1393, %v1393
    %v1403 = vmul.f32 %v1402, -0.00019511016
    %v1404 = vadd.f32 %v1403, 0.008332121
    %v1405 = vmul.f32 %v1402, %v1404
    %v1406 = vadd.f32 %v1405, -0.16666654
    %v1407 = vmul.f32 %v1402, %v1406
    %v1408 = vadd.f32 %v1407, 1.0
    %v1409 = vmul.f32 %v1408, %v1393
    %vm1410 = vweird.f32 %v188
    %v1411 = vand.u32 %v1394, 3
    %vm1412 = vcmp.lt.s32.totalorder %v1411, 2
    %vm1413 = vcmp.eq.s32.totalorder %v1411, 0
    %v1414 = vxor.u32 %v1409, 2147483648
    %v1415 = vsel %vm1413, %v1401, %v1414
    %vm1416 = vcmp.eq.s32.totalorder %v1411, 2
    %v1417 = vxor.u32 %v1401, 2147483648
    %v1418 = vsel %vm1416, %v1417, %v1409
    %v1419 = vsel %vm1412, %v1415, %v1418
    %v1420 = vsel %vm1410, nan, %v1419
    %v1421 = vld [vmem:[%s9] sm:$0xff]
    %v1422 = vld [vmem:[%s9 + $0x8] sm:$0xff]
    %v1423 = vld [vmem:[%s10] sm:$0xff]
    %vm1424 = vcmask 64512
    %v1426 = vsel %vm1424, %v79, 0
    %v1429 = vsel %vm1424, %v80, 0
    %v1432 = vsel %vm1424, %v81, 0
    %v1435 = vsel %vm1424, %v82, 0
    %v1438 = vsel %vm1424, %v83, 0
    %v1441 = vsel %vm1424, %v84, 0
    %v1444 = vsel %vm1424, %v85, 0
    %v1447 = vsel %vm1424, %v86, 0
    %1449 = vmatpush.msra.mxu0 0.0
    %1450 = vmatpush.msra.mxu0 0.0
    %1451 = vmatpush.msra.mxu0 0.0
    %1452 = vmatpush.msra.mxu0 0.0
    %1453 = vmatpush.msra.mxu0 0.0
    %1454 = vmatpush.msra.mxu0 0.0
    %1455 = vmatpush.msra.mxu0 0.0
    %1456 = vmatpush.msra.mxu0 0.0
    %1457 = vmatpush.msra.mxu0 0.0
    %1458 = vmatpush.msra.mxu0 0.0
    %1459 = vmatpush.msra.mxu0 0.0
    %1460 = vmatpush.msra.mxu0 0.0
    %1461 = vmatpush.msra.mxu0 0.0
    %1462 = vmatpush.msra.mxu0 0.0
    %1463 = vmatpush.msra.mxu0 0.0
    %1464 = vmatpush.msra.mxu0 %v1423
    %1465 = vmatmul.f32.gmra.mxu0 %v1426
    %v1466 = vpop.f32.mrf.mxu0
    %v1467 = vadd.f32 0.0, %v1466
    %1468 = vmatmul.f32.gmra.mxu0 %v1429
    %v1469 = vpop.f32.mrf.mxu0
    %v1470 = vadd.f32 0.0, %v1469
    %1471 = vmatmul.f32.gmra.mxu0 %v1432
    %v1472 = vpop.f32.mrf.mxu0
    %v1473 = vadd.f32 0.0, %v1472
    %1474 = vmatmul.f32.gmra.mxu0 %v1435
    %v1475 = vpop.f32.mrf.mxu0
    %v1476 = vadd.f32 0.0, %v1475
    %1477 = vmatmul.f32.gmra.mxu0 %v1438
    %v1478 = vpop.f32.mrf.mxu0
    %v1479 = vadd.f32 0.0, %v1478
    %1480 = vmatmul.f32.gmra.mxu0 %v1441
    %v1481 = vpop.f32.mrf.mxu0
    %v1482 = vadd.f32 0.0, %v1481
    %1483 = vmatmul.f32.gmra.mxu0 %v1444
    %v1484 = vpop.f32.mrf.mxu0
    %v1485 = vadd.f32 0.0, %v1484
    %1486 = vmatmul.f32.gmra.mxu0 %v1447
    %v1487 = vpop.f32.mrf.mxu0
    %v1488 = vadd.f32 0.0, %v1487
    %1489 = vdwg.mxu0
    %v1491 = vsel %vm101, %v71, 0
    %v1494 = vsel %vm101, %v72, 0
    %v1497 = vsel %vm101, %v73, 0
    %v1500 = vsel %vm101, %v74, 0
    %v1503 = vsel %vm101, %v75, 0
    %v1506 = vsel %vm101, %v76, 0
    %v1509 = vsel %vm101, %v77, 0
    %v1512 = vsel %vm101, %v78, 0
    %1514 = vmatpush.msra.mxu0 0.0
    %1515 = vmatpush.msra.mxu0 0.0
    %1516 = vmatpush.msra.mxu0 0.0
    %1517 = vmatpush.msra.mxu0 0.0
    %1518 = vmatpush.msra.mxu0 0.0
    %1519 = vmatpush.msra.mxu0 0.0
    %1520 = vmatpush.msra.mxu0 0.0
    %1521 = vmatpush.msra.mxu0 0.0
    %1522 = vmatpush.msra.mxu0 0.0
    %1523 = vmatpush.msra.mxu0 0.0
    %1524 = vmatpush.msra.mxu0 0.0
    %1525 = vmatpush.msra.mxu0 0.0
    %1526 = vmatpush.msra.mxu0 0.0
    %1527 = vmatpush.msra.mxu0 0.0
    %1528 = vmatpush.msra.mxu0 %v1422
    %1529 = vmatpush.msra.mxu0 %v1421
    %1530 = vmatmul.f32.gmra.mxu0 %v1491
    %v1531 = vpop.f32.mrf.mxu0
    %v1532 = vadd.f32 %v1467, %v1531
    %1533 = vmatmul.f32.gmra.mxu0 %v1494
    %v1534 = vpop.f32.mrf.mxu0
    %v1535 = vadd.f32 %v1470, %v1534
    %1536 = vmatmul.f32.gmra.mxu0 %v1497
    %v1537 = vpop.f32.mrf.mxu0
    %v1538 = vadd.f32 %v1473, %v1537
    %1539 = vmatmul.f32.gmra.mxu0 %v1500
    %v1540 = vpop.f32.mrf.mxu0
    %v1541 = vadd.f32 %v1476, %v1540
    %1542 = vmatmul.f32.gmra.mxu0 %v1503
    %v1543 = vpop.f32.mrf.mxu0
    %v1544 = vadd.f32 %v1479, %v1543
    %1545 = vmatmul.f32.gmra.mxu0 %v1506
    %v1546 = vpop.f32.mrf.mxu0
    %v1547 = vadd.f32 %v1482, %v1546
    %1548 = vmatmul.f32.gmra.mxu0 %v1509
    %v1549 = vpop.f32.mrf.mxu0
    %v1550 = vadd.f32 %v1485, %v1549
    %1551 = vmatmul.f32.gmra.mxu0 %v1512
    %v1552 = vpop.f32.mrf.mxu0
    %v1553 = vadd.f32 %v1488, %v1552
    %1554 = vdwg.mxu0
    %v1555 = vld [vmem:[%s11] sm:$0xff]
    %v1556 = vld [vmem:[%s11 + $0x8] sm:$0xff]
    %v1558 = vsel %vm101, %v342, 0
    %v1561 = vsel %vm101, %v496, 0
    %v1564 = vsel %vm101, %v650, 0
    %v1567 = vsel %vm101, %v804, 0
    %v1570 = vsel %vm101, %v958, 0
    %v1573 = vsel %vm101, %v1112, 0
    %v1576 = vsel %vm101, %v1266, 0
    %v1579 = vsel %vm101, %v1420, 0
    %1581 = vmatpush.msra.mxu0 0.0
    %1582 = vmatpush.msra.mxu0 0.0
    %1583 = vmatpush.msra.mxu0 0.0
    %1584 = vmatpush.msra.mxu0 0.0
    %1585 = vmatpush.msra.mxu0 0.0
    %1586 = vmatpush.msra.mxu0 0.0
    %1587 = vmatpush.msra.mxu0 0.0
    %1588 = vmatpush.msra.mxu0 0.0
    %1589 = vmatpush.msra.mxu0 0.0
    %1590 = vmatpush.msra.mxu0 0.0
    %1591 = vmatpush.msra.mxu0 0.0
    %1592 = vmatpush.msra.mxu0 0.0
    %1593 = vmatpush.msra.mxu0 0.0
    %1594 = vmatpush.msra.mxu0 0.0
    %1595 = vmatpush.msra.mxu0 %v1556
    %1596 = vmatpush.msra.mxu0 %v1555
    %1597 = vmatmul.f32.gmra.mxu0 %v1558
    %v1598 = vpop.f32.mrf.mxu0
    %v1599 = vadd.f32 0.0, %v1598
    %1600 = vmatmul.f32.gmra.mxu0 %v1561
    %v1601 = vpop.f32.mrf.mxu0
    %v1602 = vadd.f32 0.0, %v1601
    %1603 = vmatmul.f32.gmra.mxu0 %v1564
    %v1604 = vpop.f32.mrf.mxu0
    %v1605 = vadd.f32 0.0, %v1604
    %1606 = vmatmul.f32.gmra.mxu0 %v1567
    %v1607 = vpop.f32.mrf.mxu0
    %v1608 = vadd.f32 0.0, %v1607
    %1609 = vmatmul.f32.gmra.mxu0 %v1570
    %v1610 = vpop.f32.mrf.mxu0
    %v1611 = vadd.f32 0.0, %v1610
    %1612 = vmatmul.f32.gmra.mxu0 %v1573
    %v1613 = vpop.f32.mrf.mxu0
    %v1614 = vadd.f32 0.0, %v1613
    %1615 = vmatmul.f32.gmra.mxu0 %v1576
    %v1616 = vpop.f32.mrf.mxu0
    %v1617 = vadd.f32 0.0, %v1616
    %1618 = vmatmul.f32.gmra.mxu0 %v1579
    %v1619 = vpop.f32.mrf.mxu0
    %v1620 = vadd.f32 0.0, %v1619
    %1621 = vdwg.mxu0
    %v1622 = vadd.f32 %v1532, %v1599
    %v1623 = vadd.f32 %v1535, %v1602
    %v1624 = vadd.f32 %v1538, %v1605
    %v1625 = vadd.f32 %v1541, %v1608
    %v1626 = vadd.f32 %v1544, %v1611
    %v1627 = vadd.f32 %v1547, %v1614
    %v1628 = vadd.f32 %v1550, %v1617
    %v1629 = vadd.f32 %v1553, %v1620
    %v1630 = vld [vmem:[%s12] sm:$0x1]
    %v1632 = vperm.slane %v1630, 0
    %v1634 = vadd.f32 %v1622, %v1632
    %v1635 = vadd.f32 %v1623, %v1632
    %v1636 = vadd.f32 %v1624, %v1632
    %v1637 = vadd.f32 %v1625, %v1632
    %v1638 = vadd.f32 %v1626, %v1632
    %v1639 = vadd.f32 %v1627, %v1632
    %v1640 = vadd.f32 %v1628, %v1632
    %v1641 = vadd.f32 %v1629, %v1632
    %v1643 = vrot.slane %v123, 1
    %v1644 = vrot.slane %v123, 2
    %v1645 = vrot.slane %v123, 3
    %v1646 = vrot.slane %v123, 4
    %v1647 = vrot.slane %v123, 5
    %v1648 = vrot.slane %v123, 6
    %v1649 = vrot.slane %v123, 7
    %v1650 = vperm.slane %v123, 0
    %v1651 = vperm.slane %v1643, 0
    %v1652 = vperm.slane %v1644, 0
    %v1653 = vperm.slane %v1645, 0
    %v1654 = vperm.slane %v1646, 0
    %v1655 = vperm.slane %v1647, 0
    %v1656 = vperm.slane %v1648, 0
    %v1657 = vperm.slane %v1649, 0
    %v1666 = vmul.f32 %v1650, %v1634
    %v1667 = vmul.f32 %v1651, %v1635
    %v1668 = vmul.f32 %v1652, %v1636
    %v1669 = vmul.f32 %v1653, %v1637
    %v1670 = vmul.f32 %v1654, %v1638
    %v1671 = vmul.f32 %v1655, %v1639
    %v1672 = vmul.f32 %v1656, %v1640
    %v1673 = vmul.f32 %v1657, %v1641
    %v1674 = vld [vmem:[%s13] sm:$0xff]
    %v1675 = vld [vmem:[%s13 + $0x8] sm:$0xff]
    %v1676 = vld [vmem:[%s13 + $0x10] sm:$0xff]
    %v1677 = vld [vmem:[%s13 + $0x18] sm:$0xff]
    %vm1678 = vcmask 261120
    %v1680 = vsel %vm1678, %v1666, 0
    %v1683 = vsel %vm1678, %v1667, 0
    %v1686 = vsel %vm1678, %v1668, 0
    %v1689 = vsel %vm1678, %v1669, 0
    %v1692 = vsel %vm1678, %v1670, 0
    %v1695 = vsel %vm1678, %v1671, 0
    %v1698 = vsel %vm1678, %v1672, 0
    %v1701 = vsel %vm1678, %v1673, 0
    %1703 = vmatpush.msra.mxu0 0.0
    %1704 = vmatpush.msra.mxu0 0.0
    %1705 = vmatpush.msra.mxu0 0.0
    %1706 = vmatpush.msra.mxu0 0.0
    %1707 = vmatpush.msra.mxu0 0.0
    %1708 = vmatpush.msra.mxu0 0.0
    %1709 = vmatpush.msra.mxu0 0.0
    %1710 = vmatpush.msra.mxu0 0.0
    %1711 = vmatpush.msra.mxu0 0.0
    %1712 = vmatpush.msra.mxu0 0.0
    %1713 = vmatpush.msra.mxu0 0.0
    %1714 = vmatpush.msra.mxu0 0.0
    %1715 = vmatpush.msra.mxu0 %v1677
    %1716 = vmatpush.msra.mxu0 %v1676
    %1717 = vmatpush.msra.mxu0 %v1675
    %1718 = vmatpush.msra.mxu0 %v1674
    %1719 = vmatmul.f32.gmra.mxu0 %v1680
    %v1720 = vpop.f32.mrf.mxu0
    %v1721 = vadd.f32 0.0, %v1720
    %1722 = vmatmul.f32.gmra.mxu0 %v1683
    %v1723 = vpop.f32.mrf.mxu0
    %v1724 = vadd.f32 0.0, %v1723
    %1725 = vmatmul.f32.gmra.mxu0 %v1686
    %v1726 = vpop.f32.mrf.mxu0
    %v1727 = vadd.f32 0.0, %v1726
    %1728 = vmatmul.f32.gmra.mxu0 %v1689
    %v1729 = vpop.f32.mrf.mxu0
    %v1730 = vadd.f32 0.0, %v1729
    %1731 = vmatmul.f32.gmra.mxu0 %v1692
    %v1732 = vpop.f32.mrf.mxu0
    %v1733 = vadd.f32 0.0, %v1732
    %1734 = vmatmul.f32.gmra.mxu0 %v1695
    %v1735 = vpop.f32.mrf.mxu0
    %v1736 = vadd.f32 0.0, %v1735
    %1737 = vmatmul.f32.gmra.mxu0 %v1698
    %v1738 = vpop.f32.mrf.mxu0
    %v1739 = vadd.f32 0.0, %v1738
    %1740 = vmatmul.f32.gmra.mxu0 %v1701
    %v1741 = vpop.f32.mrf.mxu0
    %v1742 = vadd.f32 0.0, %v1741
    %1743 = vdwg.mxu0
    %vm1744 = vcmask 15360
    %v1745 = vsel %vm1744, %v1721, -inf
    %v1746 = vrot.slane %v1745, 4
    %v1747 = vmax.f32 %v1745, %v1746
    %v1748 = vrot.slane %v1747, 2
    %v1749 = vmax.f32 %v1747, %v1748
    %v1750 = vrot.slane %v1749, 1
    %v1751 = vmax.f32 %v1749, %v1750
    %v1752 = vsel %vm1744, %v1724, -inf
    %v1753 = vrot.slane %v1752, 4
    %v1754 = vmax.f32 %v1752, %v1753
    %v1755 = vrot.slane %v1754, 2
    %v1756 = vmax.f32 %v1754, %v1755
    %v1757 = vrot.slane %v1756, 1
    %v1758 = vmax.f32 %v1756, %v1757
    %v1759 = vsel %vm1744, %v1727, -inf
    %v1760 = vrot.slane %v1759, 4
    %v1761 = vmax.f32 %v1759, %v1760
    %v1762 = vrot.slane %v1761, 2
    %v1763 = vmax.f32 %v1761, %v1762
    %v1764 = vrot.slane %v1763, 1
    %v1765 = vmax.f32 %v1763, %v1764
    %v1766 = vsel %vm1744, %v1730, -inf
    %v1767 = vrot.slane %v1766, 4
    %v1768 = vmax.f32 %v1766, %v1767
    %v1769 = vrot.slane %v1768, 2
    %v1770 = vmax.f32 %v1768, %v1769
    %v1771 = vrot.slane %v1770, 1
    %v1772 = vmax.f32 %v1770, %v1771
    %v1773 = vsel %vm1744, %v1733, -inf
    %v1774 = vrot.slane %v1773, 4
    %v1775 = vmax.f32 %v1773, %v1774
    %v1776 = vrot.slane %v1775, 2
    %v1777 = vmax.f32 %v1775, %v1776
    %v1778 = vrot.slane %v1777, 1
    %v1779 = vmax.f32 %v1777, %v1778
    %v1780 = vsel %vm1744, %v1736, -inf
    %v1781 = vrot.slane %v1780, 4
    %v1782 = vmax.f32 %v1780, %v1781
    %v1783 = vrot.slane %v1782, 2
    %v1784 = vmax.f32 %v1782, %v1783
    %v1785 = vrot.slane %v1784, 1
    %v1786 = vmax.f32 %v1784, %v1785
    %v1787 = vsel %vm1744, %v1739, -inf
    %v1788 = vrot.slane %v1787, 4
    %v1789 = vmax.f32 %v1787, %v1788
    %v1790 = vrot.slane %v1789, 2
    %v1791 = vmax.f32 %v1789, %v1790
    %v1792 = vrot.slane %v1791, 1
    %v1793 = vmax.f32 %v1791, %v1792
    %v1794 = vsel %vm1744, %v1742, -inf
    %v1795 = vrot.slane %v1794, 4
    %v1796 = vmax.f32 %v1794, %v1795
    %v1797 = vrot.slane %v1796, 2
    %v1798 = vmax.f32 %v1796, %v1797
    %v1799 = vrot.slane %v1798, 1
    %v1800 = vmax.f32 %v1798, %v1799
    %v1801 = vsub.f32 %v1721, %v1751
    %v1802 = vsub.f32 %v1724, %v1758
    %v1803 = vsub.f32 %v1727, %v1765
    %v1804 = vsub.f32 %v1730, %v1772
    %v1805 = vsub.f32 %v1733, %v1779
    %v1806 = vsub.f32 %v1736, %v1786
    %v1807 = vsub.f32 %v1739, %v1793
    %v1808 = vsub.f32 %v1742, %v1800
    %v1809 = vmul.f32 %v1801, 1.442695
    %v1810 = vpow.pop %v1809
    %v1811 = vmul.f32 %v1802, 1.442695
    %v1812 = vpow.pop %v1811
    %v1813 = vmul.f32 %v1803, 1.442695
    %v1814 = vpow.pop %v1813
    %v1815 = vmul.f32 %v1804, 1.442695
    %v1816 = vpow.pop %v1815
    %v1817 = vmul.f32 %v1805, 1.442695
    %v1818 = vpow.pop %v1817
    %v1819 = vmul.f32 %v1806, 1.442695
    %v1820 = vpow.pop %v1819
    %v1821 = vmul.f32 %v1807, 1.442695
    %v1822 = vpow.pop %v1821
    %v1823 = vmul.f32 %v1808, 1.442695
    %v1824 = vpow.pop %v1823
    %v1825 = vsel %vm1744, %v1810, 0.0
    %v1826 = vrot.slane %v1825, 4
    %v1827 = vadd.f32 %v1825, %v1826
    %v1828 = vrot.slane %v1827, 2
    %v1829 = vadd.f32 %v1827, %v1828
    %v1830 = vrot.slane %v1829, 1
    %v1831 = vadd.f32 %v1829, %v1830
    %v1832 = vsel %vm1744, %v1812, 0.0
    %v1833 = vrot.slane %v1832, 4
    %v1834 = vadd.f32 %v1832, %v1833
    %v1835 = vrot.slane %v1834, 2
    %v1836 = vadd.f32 %v1834, %v1835
    %v1837 = vrot.slane %v1836, 1
    %v1838 = vadd.f32 %v1836, %v1837
    %v1839 = vsel %vm1744, %v1814, 0.0
    %v1840 = vrot.slane %v1839, 4
    %v1841 = vadd.f32 %v1839, %v1840
    %v1842 = vrot.slane %v1841, 2
    %v1843 = vadd.f32 %v1841, %v1842
    %v1844 = vrot.slane %v1843, 1
    %v1845 = vadd.f32 %v1843, %v1844
    %v1846 = vsel %vm1744, %v1816, 0.0
    %v1847 = vrot.slane %v1846, 4
    %v1848 = vadd.f32 %v1846, %v1847
    %v1849 = vrot.slane %v1848, 2
    %v1850 = vadd.f32 %v1848, %v1849
    %v1851 = vrot.slane %v1850, 1
    %v1852 = vadd.f32 %v1850, %v1851
    %v1853 = vsel %vm1744, %v1818, 0.0
    %v1854 = vrot.slane %v1853, 4
    %v1855 = vadd.f32 %v1853, %v1854
    %v1856 = vrot.slane %v1855, 2
    %v1857 = vadd.f32 %v1855, %v1856
    %v1858 = vrot.slane %v1857, 1
    %v1859 = vadd.f32 %v1857, %v1858
    %v1860 = vsel %vm1744, %v1820, 0.0
    %v1861 = vrot.slane %v1860, 4
    %v1862 = vadd.f32 %v1860, %v1861
    %v1863 = vrot.slane %v1862, 2
    %v1864 = vadd.f32 %v1862, %v1863
    %v1865 = vrot.slane %v1864, 1
    %v1866 = vadd.f32 %v1864, %v1865
    %v1867 = vsel %vm1744, %v1822, 0.0
    %v1868 = vrot.slane %v1867, 4
    %v1869 = vadd.f32 %v1867, %v1868
    %v1870 = vrot.slane %v1869, 2
    %v1871 = vadd.f32 %v1869, %v1870
    %v1872 = vrot.slane %v1871, 1
    %v1873 = vadd.f32 %v1871, %v1872
    %v1874 = vsel %vm1744, %v1824, 0.0
    %v1875 = vrot.slane %v1874, 4
    %v1876 = vadd.f32 %v1874, %v1875
    %v1877 = vrot.slane %v1876, 2
    %v1878 = vadd.f32 %v1876, %v1877
    %v1879 = vrot.slane %v1878, 1
    %v1880 = vadd.f32 %v1878, %v1879
    %v1881 = vrcp.pop %v1831
    %v1882 = vmul.f32 %v1831, %v1881
    %v1883 = vsub.f32 1.0, %v1882
    %v1884 = vmul.f32 %v1881, %v1883
    %v1885 = vadd.f32 %v1881, %v1884
    %vm1886 = vweird.f32 %v1831
    %vm1887 = vweird.f32 %v1881
    %vm1888 = vmor %vm1886, %vm1887
    %v1889 = vsel %vm1888, %v1881, %v1885
    %v1890 = vand.u32 2147483647, %v1831
    %vm1891 = vcmp.eq.f32.partialorder %v1890, 8.507059e+37
    %v1892 = vand.u32 %v1831, 2147483648
    %v1893 = vor.u32 1.1754944e-38, %v1892
    %v1894 = vsel %vm1891, %v1893, %v1889
    %v1895 = vmul.f32 1.0, %v1894
    %v1896 = vrcp.pop %v1838
    %v1897 = vmul.f32 %v1838, %v1896
    %v1898 = vsub.f32 1.0, %v1897
    %v1899 = vmul.f32 %v1896, %v1898
    %v1900 = vadd.f32 %v1896, %v1899
    %vm1901 = vweird.f32 %v1838
    %vm1902 = vweird.f32 %v1896
    %vm1903 = vmor %vm1901, %vm1902
    %v1904 = vsel %vm1903, %v1896, %v1900
    %v1905 = vand.u32 2147483647, %v1838
    %vm1906 = vcmp.eq.f32.partialorder %v1905, 8.507059e+37
    %v1907 = vand.u32 %v1838, 2147483648
    %v1908 = vor.u32 1.1754944e-38, %v1907
    %v1909 = vsel %vm1906, %v1908, %v1904
    %v1910 = vmul.f32 1.0, %v1909
    %v1911 = vrcp.pop %v1845
    %v1912 = vmul.f32 %v1845, %v1911
    %v1913 = vsub.f32 1.0, %v1912
    %v1914 = vmul.f32 %v1911, %v1913
    %v1915 = vadd.f32 %v1911, %v1914
    %vm1916 = vweird.f32 %v1845
    %vm1917 = vweird.f32 %v1911
    %vm1918 = vmor %vm1916, %vm1917
    %v1919 = vsel %vm1918, %v1911, %v1915
    %v1920 = vand.u32 2147483647, %v1845
    %vm1921 = vcmp.eq.f32.partialorder %v1920, 8.507059e+37
    %v1922 = vand.u32 %v1845, 2147483648
    %v1923 = vor.u32 1.1754944e-38, %v1922
    %v1924 = vsel %vm1921, %v1923, %v1919
    %v1925 = vmul.f32 1.0, %v1924
    %v1926 = vrcp.pop %v1852
    %v1927 = vmul.f32 %v1852, %v1926
    %v1928 = vsub.f32 1.0, %v1927
    %v1929 = vmul.f32 %v1926, %v1928
    %v1930 = vadd.f32 %v1926, %v1929
    %vm1931 = vweird.f32 %v1852
    %vm1932 = vweird.f32 %v1926
    %vm1933 = vmor %vm1931, %vm1932
    %v1934 = vsel %vm1933, %v1926, %v1930
    %v1935 = vand.u32 2147483647, %v1852
    %vm1936 = vcmp.eq.f32.partialorder %v1935, 8.507059e+37
    %v1937 = vand.u32 %v1852, 2147483648
    %v1938 = vor.u32 1.1754944e-38, %v1937
    %v1939 = vsel %vm1936, %v1938, %v1934
    %v1940 = vmul.f32 1.0, %v1939
    %v1941 = vrcp.pop %v1859
    %v1942 = vmul.f32 %v1859, %v1941
    %v1943 = vsub.f32 1.0, %v1942
    %v1944 = vmul.f32 %v1941, %v1943
    %v1945 = vadd.f32 %v1941, %v1944
    %vm1946 = vweird.f32 %v1859
    %vm1947 = vweird.f32 %v1941
    %vm1948 = vmor %vm1946, %vm1947
    %v1949 = vsel %vm1948, %v1941, %v1945
    %v1950 = vand.u32 2147483647, %v1859
    %vm1951 = vcmp.eq.f32.partialorder %v1950, 8.507059e+37
    %v1952 = vand.u32 %v1859, 2147483648
    %v1953 = vor.u32 1.1754944e-38, %v1952
    %v1954 = vsel %vm1951, %v1953, %v1949
    %v1955 = vmul.f32 1.0, %v1954
    %v1956 = vrcp.pop %v1866
    %v1957 = vmul.f32 %v1866, %v1956
    %v1958 = vsub.f32 1.0, %v1957
    %v1959 = vmul.f32 %v1956, %v1958
    %v1960 = vadd.f32 %v1956, %v1959
    %vm1961 = vweird.f32 %v1866
    %vm1962 = vweird.f32 %v1956
    %vm1963 = vmor %vm1961, %vm1962
    %v1964 = vsel %vm1963, %v1956, %v1960
    %v1965 = vand.u32 2147483647, %v1866
    %vm1966 = vcmp.eq.f32.partialorder %v1965, 8.507059e+37
    %v1967 = vand.u32 %v1866, 2147483648
    %v1968 = vor.u32 1.1754944e-38, %v1967
    %v1969 = vsel %vm1966, %v1968, %v1964
    %v1970 = vmul.f32 1.0, %v1969
    %v1971 = vrcp.pop %v1873
    %v1972 = vmul.f32 %v1873, %v1971
    %v1973 = vsub.f32 1.0, %v1972
    %v1974 = vmul.f32 %v1971, %v1973
    %v1975 = vadd.f32 %v1971, %v1974
    %vm1976 = vweird.f32 %v1873
    %vm1977 = vweird.f32 %v1971
    %vm1978 = vmor %vm1976, %vm1977
    %v1979 = vsel %vm1978, %v1971, %v1975
    %v1980 = vand.u32 2147483647, %v1873
    %vm1981 = vcmp.eq.f32.partialorder %v1980, 8.507059e+37
    %v1982 = vand.u32 %v1873, 2147483648
    %v1983 = vor.u32 1.1754944e-38, %v1982
    %v1984 = vsel %vm1981, %v1983, %v1979
    %v1985 = vmul.f32 1.0, %v1984
    %v1986 = vrcp.pop %v1880
    %v1987 = vmul.f32 %v1880, %v1986
    %v1988 = vsub.f32 1.0, %v1987
    %v1989 = vmul.f32 %v1986, %v1988
    %v1990 = vadd.f32 %v1986, %v1989
    %vm1991 = vweird.f32 %v1880
    %vm1992 = vweird.f32 %v1986
    %vm1993 = vmor %vm1991, %vm1992
    %v1994 = vsel %vm1993, %v1986, %v1990
    %v1995 = vand.u32 2147483647, %v1880
    %vm1996 = vcmp.eq.f32.partialorder %v1995, 8.507059e+37
    %v1997 = vand.u32 %v1880, 2147483648
    %v1998 = vor.u32 1.1754944e-38, %v1997
    %v1999 = vsel %vm1996, %v1998, %v1994
    %v2000 = vmul.f32 1.0, %v1999
    %v2001 = vmul.f32 %v1810, %v1895
    %v2002 = vmul.f32 %v1812, %v1910
    %v2003 = vmul.f32 %v1814, %v1925
    %v2004 = vmul.f32 %v1816, %v1940
    %v2005 = vmul.f32 %v1818, %v1955
    %v2006 = vmul.f32 %v1820, %v1970
    %v2007 = vmul.f32 %v1822, %v1985
    %v2008 = vmul.f32 %v1824, %v2000
    %v2009 = vsel %vm1744, %v2001, 0.0
    %2010 = vadd.xlane.f32.xlu0 %v2009
    %v2011 = vpop.xlane.xlu0 %2010
    %v2012 = vsel %vm1744, %v2002, 0.0
    %2013 = vadd.xlane.f32.xlu0 %v2012
    %v2014 = vpop.xlane.xlu0 %2013
    %v2015 = vsel %vm1744, %v2003, 0.0
    %2016 = vadd.xlane.f32.xlu0 %v2015
    %v2017 = vpop.xlane.xlu0 %2016
    %v2018 = vsel %vm1744, %v2004, 0.0
    %2019 = vadd.xlane.f32.xlu0 %v2018
    %v2020 = vpop.xlane.xlu0 %2019
    %v2021 = vsel %vm1744, %v2005, 0.0
    %2022 = vadd.xlane.f32.xlu0 %v2021
    %v2023 = vpop.xlane.xlu0 %2022
    %v2024 = vsel %vm1744, %v2006, 0.0
    %2025 = vadd.xlane.f32.xlu0 %v2024
    %v2026 = vpop.xlane.xlu0 %2025
    %v2027 = vsel %vm1744, %v2007, 0.0
    %2028 = vadd.xlane.f32.xlu0 %v2027
    %v2029 = vpop.xlane.xlu0 %2028
    %v2030 = vsel %vm1744, %v2008, 0.0
    %2031 = vadd.xlane.f32.xlu0 %v2030
    %v2032 = vpop.xlane.xlu0 %2031
    %s2033 = sld [smem:[#allocation2]]
    %v2034 = vstv %s2033
    %v2035 = vmul.f32 %v2011, %v2034
    %v2036 = vmul.f32 %v2014, %v2034
    %v2037 = vmul.f32 %v2017, %v2034
    %v2038 = vmul.f32 %v2020, %v2034
    %v2039 = vmul.f32 %v2023, %v2034
    %v2040 = vmul.f32 %v2026, %v2034
    %v2041 = vmul.f32 %v2029, %v2034
    %v2042 = vmul.f32 %v2032, %v2034
    %v2051 = vlaneseq
    %v2052 = vand.u32 %v2051, 127
    %v2053 = vperm.slane %v2035, %v2052
    %v2054 = vperm.slane %v2036, %v2052
    %v2055 = vperm.slane %v2037, %v2052
    %v2056 = vperm.slane %v2038, %v2052
    %v2057 = vperm.slane %v2039, %v2052
    %v2058 = vperm.slane %v2040, %v2052
    %v2059 = vperm.slane %v2041, %v2052
    %v2060 = vperm.slane %v2042, %v2052
    %vm2061 = vcmask 1041409
    %v2062 = vsel %vm2061, %v2054, %v2053
    %vm2063 = vcmask 1042434
    %v2064 = vsel %vm2063, %v2055, %v2062
    %vm2065 = vcmask 1043459
    %v2066 = vsel %vm2065, %v2056, %v2064
    %vm2067 = vcmask 1044484
    %v2068 = vsel %vm2067, %v2057, %v2066
    %vm2069 = vcmask 1045509
    %v2070 = vsel %vm2069, %v2058, %v2068
    %vm2071 = vcmask 1046534
    %v2072 = vsel %vm2071, %v2059, %v2070
    %vm2073 = vcmask 1047559
    %v2074 = vsel %vm2073, %v2060, %v2072
    %2076 = vst.msk [vmem:[#allocation5] sm:$0xff] %vm1424, %v2074
    %v2077 = vld [vmem:[%s14] sm:$0x3]
    %v2079 = vsel %vm1744, %v2001, 0
    %v2082 = vsel %vm1744, %v2002, 0
    %v2085 = vsel %vm1744, %v2003, 0
    %v2088 = vsel %vm1744, %v2004, 0
    %v2091 = vsel %vm1744, %v2005, 0
    %v2094 = vsel %vm1744, %v2006, 0
    %v2097 = vsel %vm1744, %v2007, 0
    %v2100 = vsel %vm1744, %v2008, 0
    %vm2102 = vcmask 1041408
    %v2104 = vsel %vm2102, %v2077, 0
    %2106 = vmatpush.msra.mxu0 0.0
    %2107 = vmatpush.msra.mxu0 0.0
    %2108 = vmatpush.msra.mxu0 0.0
    %2109 = vmatpush.msra.mxu0 0.0
    %2110 = vmatpush.msra.mxu0 0.0
    %2111 = vmatpush.msra.mxu0 0.0
    %2112 = vmatpush.msra.mxu0 0.0
    %2113 = vmatpush.msra.mxu0 0.0
    %2114 = vmatpush.msra.mxu0 0.0
    %2115 = vmatpush.msra.mxu0 0.0
    %2116 = vmatpush.msra.mxu0 0.0
    %2117 = vmatpush.msra.mxu0 0.0
    %2118 = vmatpush.msra.mxu0 0.0
    %2119 = vmatpush.msra.mxu0 0.0
    %2120 = vmatpush.msra.mxu0 0.0
    %2121 = vmatpush.msra.mxu0 %v2104
    %2122 = vmatmul.f32.gmra.mxu0 %v2079
    %v2123 = vpop.f32.mrf.mxu0
    %v2124 = vadd.f32 0.0, %v2123
    %2125 = vmatmul.f32.gmra.mxu0 %v2082
    %v2126 = vpop.f32.mrf.mxu0
    %v2127 = vadd.f32 0.0, %v2126
    %2128 = vmatmul.f32.gmra.mxu0 %v2085
    %v2129 = vpop.f32.mrf.mxu0
    %v2130 = vadd.f32 0.0, %v2129
    %2131 = vmatmul.f32.gmra.mxu0 %v2088
    %v2132 = vpop.f32.mrf.mxu0
    %v2133 = vadd.f32 0.0, %v2132
    %2134 = vmatmul.f32.gmra.mxu0 %v2091
    %v2135 = vpop.f32.mrf.mxu0
    %v2136 = vadd.f32 0.0, %v2135
    %2137 = vmatmul.f32.gmra.mxu0 %v2094
    %v2138 = vpop.f32.mrf.mxu0
    %v2139 = vadd.f32 0.0, %v2138
    %2140 = vmatmul.f32.gmra.mxu0 %v2097
    %v2141 = vpop.f32.mrf.mxu0
    %v2142 = vadd.f32 0.0, %v2141
    %2143 = vmatmul.f32.gmra.mxu0 %v2100
    %v2144 = vpop.f32.mrf.mxu0
    %v2145 = vadd.f32 0.0, %v2144
    %2146 = vdwg.mxu0
    %2155 = vrot.lane.b32.xlu0 %v1634, 96
    %v2156 = vpop.permute.xlu0 %2155
    %2157 = vrot.lane.b32.xlu0 %v1635, 96
    %v2158 = vpop.permute.xlu0 %2157
    %2159 = vrot.lane.b32.xlu0 %v1636, 96
    %v2160 = vpop.permute.xlu0 %2159
    %2161 = vrot.lane.b32.xlu0 %v1637, 96
    %v2162 = vpop.permute.xlu0 %2161
    %2163 = vrot.lane.b32.xlu0 %v1638, 96
    %v2164 = vpop.permute.xlu0 %2163
    %2165 = vrot.lane.b32.xlu0 %v1639, 96
    %v2166 = vpop.permute.xlu0 %2165
    %2167 = vrot.lane.b32.xlu0 %v1640, 96
    %v2168 = vpop.permute.xlu0 %2167
    %2169 = vrot.lane.b32.xlu0 %v1641, 96
    %v2170 = vpop.permute.xlu0 %2169
    %v2179 = vmul.f32 %v2124, %v2156
    %v2180 = vmul.f32 %v2127, %v2158
    %v2181 = vmul.f32 %v2130, %v2160
    %v2182 = vmul.f32 %v2133, %v2162
    %v2183 = vmul.f32 %v2136, %v2164
    %v2184 = vmul.f32 %v2139, %v2166
    %v2185 = vmul.f32 %v2142, %v2168
    %v2186 = vmul.f32 %v2145, %v2170
    %v2187 = vsel %vm1678, %v2179, 0.0
    %v2188 = vrot.slane %v2187, 4
    %v2189 = vadd.f32 %v2187, %v2188
    %v2190 = vrot.slane %v2189, 2
    %v2191 = vadd.f32 %v2189, %v2190
    %v2192 = vrot.slane %v2191, 1
    %v2193 = vadd.f32 %v2191, %v2192
    %v2194 = vsel %vm1678, %v2180, 0.0
    %v2195 = vrot.slane %v2194, 4
    %v2196 = vadd.f32 %v2194, %v2195
    %v2197 = vrot.slane %v2196, 2
    %v2198 = vadd.f32 %v2196, %v2197
    %v2199 = vrot.slane %v2198, 1
    %v2200 = vadd.f32 %v2198, %v2199
    %v2201 = vsel %vm1678, %v2181, 0.0
    %v2202 = vrot.slane %v2201, 4
    %v2203 = vadd.f32 %v2201, %v2202
    %v2204 = vrot.slane %v2203, 2
    %v2205 = vadd.f32 %v2203, %v2204
    %v2206 = vrot.slane %v2205, 1
    %v2207 = vadd.f32 %v2205, %v2206
    %v2208 = vsel %vm1678, %v2182, 0.0
    %v2209 = vrot.slane %v2208, 4
    %v2210 = vadd.f32 %v2208, %v2209
    %v2211 = vrot.slane %v2210, 2
    %v2212 = vadd.f32 %v2210, %v2211
    %v2213 = vrot.slane %v2212, 1
    %v2214 = vadd.f32 %v2212, %v2213
    %v2215 = vsel %vm1678, %v2183, 0.0
    %v2216 = vrot.slane %v2215, 4
    %v2217 = vadd.f32 %v2215, %v2216
    %v2218 = vrot.slane %v2217, 2
    %v2219 = vadd.f32 %v2217, %v2218
    %v2220 = vrot.slane %v2219, 1
    %v2221 = vadd.f32 %v2219, %v2220
    %v2222 = vsel %vm1678, %v2184, 0.0
    %v2223 = vrot.slane %v2222, 4
    %v2224 = vadd.f32 %v2222, %v2223
    %v2225 = vrot.slane %v2224, 2
    %v2226 = vadd.f32 %v2224, %v2225
    %v2227 = vrot.slane %v2226, 1
    %v2228 = vadd.f32 %v2226, %v2227
    %v2229 = vsel %vm1678, %v2185, 0.0
    %v2230 = vrot.slane %v2229, 4
    %v2231 = vadd.f32 %v2229, %v2230
    %v2232 = vrot.slane %v2231, 2
    %v2233 = vadd.f32 %v2231, %v2232
    %v2234 = vrot.slane %v2233, 1
    %v2235 = vadd.f32 %v2233, %v2234
    %v2236 = vsel %vm1678, %v2186, 0.0
    %v2237 = vrot.slane %v2236, 4
    %v2238 = vadd.f32 %v2236, %v2237
    %v2239 = vrot.slane %v2238, 2
    %v2240 = vadd.f32 %v2238, %v2239
    %v2241 = vrot.slane %v2240, 1
    %v2242 = vadd.f32 %v2240, %v2241
    %v2243 = vld [vmem:[%s15] sm:$0xff]
    %v2244 = vld [vmem:[%s15 + $0x8] sm:$0xff]
    %v2245 = vld [vmem:[%s16] sm:$0xff]
    %v2246 = vld [vmem:[%s16 + $0x8] sm:$0xff]
    %v2247 = vld [vmem:[%s16 + $0x10] sm:$0xff]
    %v2248 = vld [vmem:[%s16 + $0x18] sm:$0xff]
    %v2257 = vsel %vm2061, %v2200, %v2193
    %v2258 = vsel %vm2063, %v2207, %v2257
    %v2259 = vsel %vm2065, %v2214, %v2258
    %v2260 = vsel %vm2067, %v2221, %v2259
    %v2261 = vsel %vm2069, %v2228, %v2260
    %v2262 = vsel %vm2071, %v2235, %v2261
    %v2263 = vsel %vm2073, %v2242, %v2262
    %v2264 = vsel %vm1678, %v2263, 0
    %2266 = vmatpush.msra.mxu0 0.0
    %2267 = vmatpush.msra.mxu0 0.0
    %2268 = vmatpush.msra.mxu0 0.0
    %2269 = vmatpush.msra.mxu0 0.0
    %2270 = vmatpush.msra.mxu0 0.0
    %2271 = vmatpush.msra.mxu0 0.0
    %2272 = vmatpush.msra.mxu0 0.0
    %2273 = vmatpush.msra.mxu0 0.0
    %2274 = vmatpush.msra.mxu0 0.0
    %2275 = vmatpush.msra.mxu0 0.0
    %2276 = vmatpush.msra.mxu0 0.0
    %2277 = vmatpush.msra.mxu0 0.0
    %2278 = vmatpush.msra.mxu0 %v2248
    %2279 = vmatpush.msra.mxu0 %v2247
    %2280 = vmatpush.msra.mxu0 %v2246
    %2281 = vmatpush.msra.mxu0 %v2245
    %2282 = vmatmul.f32.gmra.mxu0 %v2264
    %v2283 = vpop.f32.mrf.mxu0
    %v2284 = vadd.f32 0.0, %v2283
    %2285 = vdwg.mxu0
    %2286 = vmatpush.msra.mxu0 0.0
    %2287 = vmatpush.msra.mxu0 0.0
    %2288 = vmatpush.msra.mxu0 0.0
    %2289 = vmatpush.msra.mxu0 0.0
    %2290 = vmatpush.msra.mxu0 0.0
    %2291 = vmatpush.msra.mxu0 0.0
    %2292 = vmatpush.msra.mxu0 0.0
    %2293 = vmatpush.msra.mxu0 0.0
    %2294 = vmatpush.msra.mxu0 0.0
    %2295 = vmatpush.msra.mxu0 0.0
    %2296 = vmatpush.msra.mxu0 0.0
    %2297 = vmatpush.msra.mxu0 0.0
    %2298 = vmatpush.msra.mxu0 0.0
    %2299 = vmatpush.msra.mxu0 0.0
    %2300 = vmatpush.msra.mxu0 %v2244
    %2301 = vmatpush.msra.mxu0 %v2243
    %2302 = vmatmul.f32.gmra.mxu0 %v103
    %v2303 = vpop.f32.mrf.mxu0
    %v2304 = vadd.f32 %v2284, %v2303
    %2305 = vdwg.mxu0
    %v2306 = vld [vmem:[%s17] sm:$0x1]
    %v2308 = vperm.slane %v2306, 0
    %v2310 = vadd.f32 %v2304, %v2308
    %v2311 = vmax.f32 %v2310, 0.0
    %v2312 = vld [vmem:[%s18] sm:$0xff]
    %v2313 = vld [vmem:[%s18 + $0x8] sm:$0xff]
    %v2314 = vld [vmem:[%s19] sm:$0x1]
    %v2316 = vperm.slane %v2314, 0
    %v2319 = vsel %vm101, %v2311, 0
    %2321 = vmatpush.msra.mxu0 0.0
    %2322 = vmatpush.msra.mxu0 0.0
    %2323 = vmatpush.msra.mxu0 0.0
    %2324 = vmatpush.msra.mxu0 0.0
    %2325 = vmatpush.msra.mxu0 0.0
    %2326 = vmatpush.msra.mxu0 0.0
    %2327 = vmatpush.msra.mxu0 0.0
    %2328 = vmatpush.msra.mxu0 0.0
    %2329 = vmatpush.msra.mxu0 0.0
    %2330 = vmatpush.msra.mxu0 0.0
    %2331 = vmatpush.msra.mxu0 0.0
    %2332 = vmatpush.msra.mxu0 0.0
    %2333 = vmatpush.msra.mxu0 0.0
    %2334 = vmatpush.msra.mxu0 0.0
    %2335 = vmatpush.msra.mxu0 %v2313
    %2336 = vmatpush.msra.mxu0 %v2312
    %2337 = vmatmul.f32.gmra.mxu0 %v2319
    %v2338 = vpop.f32.mrf.mxu0
    %v2339 = vadd.f32 %v2316, %v2338
    %2340 = vdwg.mxu0
    %2341 = vst.msk [vmem:[#allocation3] sm:$0xff] %vm101, %v2339
    // Predicated region
    $region82: #{tpu_custom_call.1} parent=1 // pred_check
      _
    $region83: #{tpu_custom_call.1} parent=1 // pred_check_branch
      %2343 = sbr.rel (0) target = $region85
    $region84: #{tpu_custom_call.1} parent=1 // pred_region
      %2345 = vsyncadd [#allocation4], 0
      %s2347 = sshll.u32 [#allocation3], 4
      %s2348 = int_to_ptr.vmem [resolvable:$true] %s2347
      %s2349 = sshll.u32 %s20, 4
      %s2350 = int_to_ptr.hbm [resolvable:$true] %s2349
      %2352 = dma.vmem_to_hbm [thread:$0]  %s2348, 128, %s2350, [#allocation4]
    $region85: #{tpu_custom_call.1} parent=1 // pred_fallthru
      _
    // Predicated region
    $region86: #{tpu_custom_call.1} parent=1 // pred_check
      _
    $region87: #{tpu_custom_call.1} parent=1 // pred_check_branch
      %2354 = sbr.rel (0) target = $region89
    $region88: #{tpu_custom_call.1} parent=1 // pred_region
      %2356 = vsyncadd [#allocation6], 0
      %s2358 = sshll.u32 [#allocation5], 4
      %s2359 = int_to_ptr.vmem [resolvable:$true] %s2358
      %s2360 = sshll.u32 %s21, 4
      %s2361 = int_to_ptr.hbm [resolvable:$true] %s2360
      %2363 = dma.vmem_to_hbm [thread:$0]  %s2359, 128, %s2361, [#allocation6]
    $region89: #{tpu_custom_call.1} parent=1 // pred_fallthru
      _
    // Predicated region
    $region90: #{tpu_custom_call.1} parent=1 // pred_check
      _
    $region91: #{tpu_custom_call.1} parent=1 // pred_check_branch
      %2365 = sbr.rel (0) target = $region93
    $region92: #{tpu_custom_call.1} parent=1 // pred_region
      %2367 = dma.done [#allocation4], 128
    $region93: #{tpu_custom_call.1} parent=1 // pred_fallthru
      _
    // Predicated region
    $region94: #{tpu_custom_call.1} parent=1 // pred_check
      _
    $region95: #{tpu_custom_call.1} parent=1 // pred_check_branch
      %2369 = sbr.rel (0) target = $region97
    $region96: #{tpu_custom_call.1} parent=1 // pred_region
      %2371 = dma.done [#allocation6], 128
    $region97: #{tpu_custom_call.1} parent=1 // pred_fallthru
      _
    %2372 = vsyncpa [#allocation4], 1
    %2373 = vsyncpa [#allocation6], 1

</llo_original>
